<compile_context>
chip_gen: v7x
topology: tpu7x:2x2x1
jax: 0.10.0
libtpu: 0.0.40
codegen_flags: <defaults>
</compile_context>

<pallas_src>
import functools

import jax
import jax.numpy as jnp
from jax import lax
from jax.experimental import pallas as pl
from jax.experimental.pallas import tpu as pltpu

_LANE = 128


# ---------------------------------------------------------------------------
# Small in-kernel helpers
# ---------------------------------------------------------------------------

def _bf16(v):
    return v.astype(jnp.bfloat16)


def _mlp2(h, w1_ref, b1_ref, w2_ref, b2_ref):
    """linear -> relu -> linear (matches input_layer / output_layer)."""
    f32 = jnp.float32
    h = jnp.dot(_bf16(h), w1_ref[...], preferred_element_type=f32) + b1_ref[...]
    h = jnp.maximum(h, 0.0)
    return jnp.dot(_bf16(h), w2_ref[...], preferred_element_type=f32) + b2_ref[...]


def _pair_norm(out, row_mask, inv_n):
    """PairNorm using only the true node rows (pad rows are kept at zero)."""
    mu = jnp.sum(out, axis=0, keepdims=True) * inv_n
    c = (out - mu) * row_mask                      # re-zero pad rows
    msq = jnp.sum(jnp.sum(c * c, axis=1, keepdims=True),
                  axis=0, keepdims=True) * inv_n + 1e-6
    return c * lax.rsqrt(msq)                      # rsqrt -> EUP slot


# ---------------------------------------------------------------------------
# Kernel A: adjacency VMEM-resident (small graphs), DMA overlapped w/ input MLP
# ---------------------------------------------------------------------------

def _gnn_kernel_resident(x_ref, in_w1, in_b1, in_w2, in_b2, wcat_ref,
                         out_w1, out_b1, out_w2, out_b2, adj_hbm,
                         o_ref, adj_i8, adj_sem,
                         *, num_layers, hid_pad, n_real, pair_norm):
    f32 = jnp.float32
    n_pad = o_ref.shape[0]

    # Kick off the whole-adjacency DMA (int8 = half the HBM bytes of bf16) and
    # hide it behind the input MLP, which needs no adjacency.
    adj_copy = pltpu.make_async_copy(adj_hbm, adj_i8, adj_sem)
    adj_copy.start()

    row_mask = (lax.broadcasted_iota(jnp.int32, (n_pad, 1), 0) < n_real).astype(f32)
    inv_n = 1.0 / float(n_real)

    h = _mlp2(x_ref[...], in_w1, in_b1, in_w2, in_b2) * row_mask   # zero pad rows

    adj_copy.wait()

    def layer_body(l, h):
        # Fused projection: h @ [W | W + W_self] -> [S | Wx] (lane-dense, bf16 MXU).
        t = jnp.dot(_bf16(h), wcat_ref[l], preferred_element_type=f32)
        s, wx = t[:, :hid_pad], t[:, hid_pad:]
        # (I + adj) @ S + h @ W_self == adj @ S + (S + h @ W_self) == adj @ S + wx.
        # Adjacency is re-read from its ref each layer (no long-lived [N,N] value).
        out = jnp.dot(_bf16(adj_i8[...]), _bf16(s), preferred_element_type=f32) + wx
        out = jnp.maximum(out, 0.0)
        if pair_norm:
            out = _pair_norm(out, row_mask, inv_n)
        return out

    if num_layers <= 4:                       # short: keep the unroll
        for l in range(num_layers):
            h = layer_body(l, h)
    else:                                     # deep: rolled loop bounds live ranges
        h = lax.fori_loop(0, num_layers, layer_body, h)

    o_ref[...] = _mlp2(h, out_w1, out_b1, out_w2, out_b2).astype(o_ref.dtype)


# ---------------------------------------------------------------------------
# Kernel B: adjacency streamed from HBM in double-buffered row tiles per layer
# ---------------------------------------------------------------------------

def _gnn_kernel_tiled(x_ref, in_w1, in_b1, in_w2, in_b2, wcat_ref,
                      out_w1, out_b1, out_w2, out_b2, adj_hbm,
                      o_ref, adj_buf, adj_sem, s_bf, agg,
                      *, num_layers, hid_pad, n_real, pair_norm,
                      row_tile, n_row_tiles):
    f32 = jnp.float32
    n_pad = o_ref.shape[0]

    row_mask = (lax.broadcasted_iota(jnp.int32, (n_pad, 1), 0) < n_real).astype(f32)
    inv_n = 1.0 / float(n_real)

    h = _mlp2(x_ref[...], in_w1, in_b1, in_w2, in_b2) * row_mask

    def fetch(rt, slot):
        start = pl.multiple_of(rt * row_tile, row_tile)
        pltpu.make_async_copy(adj_hbm.at[pl.ds(start, row_tile), :],
                              adj_buf.at[slot], adj_sem.at[slot]).start()

    def wait_fetch(slot):
        pltpu.make_async_copy(adj_hbm.at[pl.ds(0, row_tile), :],
                              adj_buf.at[slot], adj_sem.at[slot]).wait()

    def layer_body(l, h):
        # Prefetch adjacency row-tile 0; it streams behind the projection matmul.
        fetch(0, 0)
        t = jnp.dot(_bf16(h), wcat_ref[l], preferred_element_type=f32)
        s_bf[...] = _bf16(t[:, :hid_pad])          # S stays resident in VMEM
        wx = t[:, hid_pad:]

        @pl.loop(0, n_row_tiles)
        def _(rt):
            slot = lax.rem(rt, 2)
            wait_fetch(slot)

            @pl.when(rt + 1 < n_row_tiles)
            def _():
                fetch(rt + 1, 1 - slot)

            r0 = pl.multiple_of(rt * row_tile, row_tile)
            agg[pl.ds(r0, row_tile), :] = jnp.dot(
                _bf16(adj_buf[slot]), s_bf[...], preferred_element_type=f32)

        out = jnp.maximum(agg[...] + wx, 0.0)
        if pair_norm:
            out = _pair_norm(out, row_mask, inv_n)
        return out

    if num_layers <= 4:
        for l in range(num_layers):
            h = layer_body(l, h)
    else:
        h = lax.fori_loop(0, num_layers, layer_body, h)

    o_ref[...] = _mlp2(h, out_w1, out_b1, out_w2, out_b2).astype(o_ref.dtype)


# ---------------------------------------------------------------------------
# One-time preprocessing (hoisted out of the forward path)
# ---------------------------------------------------------------------------

def _round_up(v, m=_LANE):
    return ((v + m - 1) // m) * m


def _pad2(a, rows, cols, dtype=jnp.float32):
    a = jnp.asarray(a, jnp.float32)
    return jnp.pad(a, ((0, rows - a.shape[0]), (0, cols - a.shape[1]))).astype(dtype)


def prepare_gnn_inputs(params, adj):
    """Pad + cast params and adjacency once (NOT per forward)."""
    n = adj.shape[0]
    in_c, hid_c = params["in_w1"].shape
    out_c = params["out_w1"].shape[1]
    num_layers = len(params["gc_w"])

    n_pad = _round_up(n)
    in_pad, hid_pad, out_pad = _round_up(in_c), _round_up(hid_c), _round_up(out_c)
    bf16 = jnp.bfloat16

    if num_layers > 0:
        # Per-layer fused projection weights [W | W + W_self], stacked over layers.
        wcat = jnp.stack(
            [jnp.concatenate(
                [_pad2(w, hid_pad, hid_pad),
                 _pad2(w, hid_pad, hid_pad) + _pad2(sw, hid_pad, hid_pad)], axis=1)
             for w, sw in zip(params["gc_w"], params["gc_sw"])], axis=0).astype(bf16)
    else:
        wcat = jnp.zeros((1, hid_pad, 2 * hid_pad), bf16)

    return dict(
        n=n, n_pad=n_pad, in_c=in_c, in_pad=in_pad, hid_pad=hid_pad,
        out_c=out_c, out_pad=out_pad, num_layers=num_layers,
        # 0/1 adjacency -> int8 storage is exact and halves the HBM stream.
        adj_i8=jnp.pad(jnp.asarray(adj, jnp.float32),
                       ((0, n_pad - n), (0, n_pad - n))).astype(jnp.int8),
        wcat=wcat,
        in_w1=_pad2(params["in_w1"], in_pad, hid_pad, bf16),
        in_b1=_pad2(params["in_b1"], 1, hid_pad),
        in_w2=_pad2(params["in_w2"], hid_pad, hid_pad, bf16),
        in_b2=_pad2(params["in_b2"], 1, hid_pad),
        out_w1=_pad2(params["out_w1"], hid_pad, out_pad, bf16),
        out_b1=_pad2(params["out_b1"], 1, out_pad),
        out_w2=_pad2(params["out_w2"], out_pad, out_pad, bf16),
        out_b2=_pad2(params["out_b2"], 1, out_pad),
    )


# ---------------------------------------------------------------------------
# Forward wrapper: mode selection, generation-aware VMEM cap, single pallas_call
# ---------------------------------------------------------------------------

def gnn_forward(prep, x, pair_norm=False, force_tiled=None, row_tile=None):
    n, n_pad = prep["n"], prep["n_pad"]
    in_pad, hid_pad, out_pad = prep["in_pad"], prep["hid_pad"], prep["out_pad"]
    num_layers = prep["num_layers"]

    x_p = _pad2(x, n_pad, in_pad, jnp.bfloat16)

    # Generation-aware VMEM budget (v5e/v6e: 128 MiB, v7x: 64 MiB per TC).
    try:
        vmem_cap = int(pltpu.get_tpu_info().vmem_capacity_bytes)
    except Exception:
        vmem_cap = 64 * 2**20

    weight_keys = ("in_w1", "in_b1", "in_w2", "in_b2", "wcat",
                   "out_w1", "out_b1", "out_w2", "out_b2")
    weights_bytes = sum(int(prep[k].size) * prep[k].dtype.itemsize for k in weight_keys)
    act_bytes = 12 * n_pad * hid_pad * 4 + n_pad * in_pad * 2 + n_pad * out_pad * 4
    resident_live = 3 * n_pad * n_pad + weights_bytes + act_bytes

    tiled = force_tiled if force_tiled is not None else (resident_live > 0.7 * vmem_cap)

    if row_tile is None:
        row_tile = 256 if (n_pad % 256 == 0 and n_pad >= 512) else 128
    row_tile = min(row_tile, n_pad)
    assert n_pad % row_tile == 0
    n_row_tiles = n_pad // row_tile

    operands = (x_p, prep["in_w1"], prep["in_b1"], prep["in_w2"], prep["in_b2"],
                prep["wcat"], prep["out_w1"], prep["out_b1"], prep["out_w2"],
                prep["out_b2"], prep["adj_i8"])
    in_specs = ([pl.BlockSpec(memory_space=pltpu.MemorySpace.VMEM)] * (len(operands) - 1)
                + [pl.BlockSpec(memory_space=pl.ANY)])       # adjacency stays in HBM

    if tiled:
        kernel = functools.partial(
            _gnn_kernel_tiled, num_layers=num_layers, hid_pad=hid_pad, n_real=n,
            pair_norm=pair_norm, row_tile=row_tile, n_row_tiles=n_row_tiles)
        scratch = [pltpu.VMEM((2, row_tile, n_pad), jnp.int8),     # adj row-tile double buffer
                   pltpu.SemaphoreType.DMA((2,)),
                   pltpu.VMEM((n_pad, hid_pad), jnp.bfloat16),     # S (resident)
                   pltpu.VMEM((n_pad, hid_pad), jnp.float32)]      # aggregation
        live = 6 * row_tile * n_pad + weights_bytes + act_bytes + 6 * n_pad * hid_pad
        adj_reads = num_layers
    else:
        kernel = functools.partial(
            _gnn_kernel_resident, num_layers=num_layers, hid_pad=hid_pad, n_real=n,
            pair_norm=pair_norm)
        scratch = [pltpu.VMEM((n_pad, n_pad), jnp.int8),
                   pltpu.SemaphoreType.DMA]
        live = resident_live
        adj_reads = 1

    vmem_limit = int(min(0.9 * vmem_cap, max(32 * 2**20, 2 * live)))

    flops = (2 * n_pad * in_pad * hid_pad + 2 * n_pad * hid_pad * hid_pad
             + num_layers * (2 * n_pad * hid_pad * 2 * hid_pad + 2 * n_pad * n_pad * hid_pad)
             + 2 * n_pad * hid_pad * out_pad + 2 * n_pad * out_pad * out_pad)
    bytes_accessed = (sum(int(a.size) * a.dtype.itemsize for a in operands[:-1])
                      + adj_reads * n_pad * n_pad + n_pad * out_pad * 4)
    cost = pl.CostEstimate(flops=int(flops),
                           transcendentals=int(num_layers if pair_norm else 0),
                           bytes_accessed=int(bytes_accessed))

    y = pl.pallas_call(
        kernel,
        out_shape=jax.ShapeDtypeStruct((n_pad, out_pad), jnp.float32),
        in_specs=in_specs,
        out_specs=pl.BlockSpec(memory_space=pltpu.MemorySpace.VMEM),
        scratch_shapes=scratch,
        compiler_params=pltpu.CompilerParams(vmem_limit_bytes=vmem_limit),
        cost_estimate=cost,
    )(*operands)
    return y[:n, :prep["out_c"]]


# ---------------------------------------------------------------------------
# Parameters + pure-JAX reference (mirrors the kernel's bf16-operand / f32-acc
# matmul precision; 0/1 adjacency is exact in both int8 and bf16)
# ---------------------------------------------------------------------------

def xavier_uniform(key, fan_in, fan_out):
    bound = jnp.sqrt(6.0 / (fan_in + fan_out))
    return jax.random.uniform(key, (fan_in, fan_out), jnp.float32, -bound, bound)


def init_gnn_params(key, in_channels, out_channels, hidden_channels, nb_hidlayers):
    keys = jax.random.split(key, 4 + 2 * nb_hidlayers)
    params = {
        "in_w1": xavier_uniform(keys[0], in_channels, hidden_channels),
        "in_b1": jnp.zeros((1, hidden_channels), jnp.float32),
        "in_w2": xavier_uniform(keys[1], hidden_channels, hidden_channels),
        "in_b2": jnp.zeros((1, hidden_channels), jnp.float32),
        "out_w1": xavier_uniform(keys[2], hidden_channels, out_channels),
        "out_b1": jnp.zeros((1, out_channels), jnp.float32),
        "out_w2": xavier_uniform(keys[3], out_channels, out_channels),
        "out_b2": jnp.zeros((1, out_channels), jnp.float32),
        "gc_w": [], "gc_sw": [],
    }
    for i in range(nb_hidlayers):
        params["gc_w"].append(xavier_uniform(keys[4 + 2 * i], hidden_channels, hidden_channels))
        params["gc_sw"].append(xavier_uniform(keys[5 + 2 * i], hidden_channels, hidden_channels))
    return params


def gnn_reference(params, x, adj, pair_norm=False):
    f32, bf16 = jnp.float32, jnp.bfloat16

    def bdot(a, b):
        return jnp.dot(a.astype(bf16), b.astype(bf16), preferred_element_type=f32)

    def mlp(h, w1, b1, w2, b2):
        return bdot(jnp.maximum(bdot(h, w1) + b1, 0.0), w2) + b2

    h = mlp(x, params["in_w1"], params["in_b1"], params["in_w2"], params["in_b2"])
    for w, sw in zip(params["gc_w"], params["gc_sw"]):
        s = bdot(h, w)
        wx = bdot(h, w + sw)                      # kernel fuses [W | W + W_self]
        out = bdot(adj, s) + wx                   # (I+adj)@s + h@W_self == adj@s + wx
        out = jnp.maximum(out, 0.0)
        if pair_norm:
            out = out - jnp.mean(out, axis=0, keepdims=True)
            out = out / jnp.sqrt(jnp.mean(jnp.sum(out * out, axis=1) + 1e-6))
        h = out
    return mlp(h, params["out_w1"], params["out_b1"], params["out_w2"], params["out_b2"])


if __name__ == "__main__":
    key = jax.random.PRNGKey(0)

    def make_graph(k, n, in_c, p=0.3):
        k_x, k_adj = jax.random.split(k)
        x = jax.random.normal(k_x, (n, in_c), jnp.float32)
        a = (jax.random.uniform(k_adj, (n, n)) < p).astype(jnp.float32)
        adj = jnp.clip(a + a.T, 0.0, 1.0) * (1.0 - jnp.eye(n, dtype=jnp.float32))
        return x, adj

    # (name, nodes, in_c, hid_c, out_c, layers, pair_norm, force_tiled)
    configs = [
        ("small-resident",     8,   4, 32, 4, 2, False, None),   # whole-adj DMA + unroll
        ("small-resident-pn",  8,   4, 32, 4, 2, True,  None),   # + PairNorm w/ pad mask
        ("tiled-streaming-pn", 200, 4, 32, 4, 2, True,  True),   # double-buffered row tiles
        ("deep-fori-pn",       8,   4, 32, 4, 6, True,  None),   # rolled layer loop
    ]

    for i, (name, n, in_c, hid_c, out_c, nlayers, pn, tiled) in enumerate(configs):
        kg, kp = jax.random.split(jax.random.fold_in(key, i))
        x, adj = make_graph(kg, n, in_c)
        params = init_gnn_params(kp, in_c, out_c, hid_c, nlayers)
        prep = prepare_gnn_inputs(params, adj)

        out = jax.block_until_ready(gnn_forward(prep, x, pair_norm=pn, force_tiled=tiled))
        ref = gnn_reference(params, x, adj, pair_norm=pn)

        assert out.shape == (n, out_c), f"{name}: bad shape {out.shape}"
        assert jnp.allclose(out, ref, atol=1e-2, rtol=1e-2), f"{name}: mismatch"

    print("KERNEL_OK")
</pallas_src>

<mosaic_0001>
module attributes {stable_mosaic.version = 11 : i64} {
  func.func @_gnn_kernel_resident(%arg0: memref<128x128xbf16, #tpu.memory_space<vmem>>, %arg1: memref<128x128xbf16, #tpu.memory_space<vmem>>, %arg2: memref<1x128xf32, #tpu.memory_space<vmem>>, %arg3: memref<128x128xbf16, #tpu.memory_space<vmem>>, %arg4: memref<1x128xf32, #tpu.memory_space<vmem>>, %arg5: memref<2x128x256xbf16, #tpu.memory_space<vmem>>, %arg6: memref<128x128xbf16, #tpu.memory_space<vmem>>, %arg7: memref<1x128xf32, #tpu.memory_space<vmem>>, %arg8: memref<128x128xbf16, #tpu.memory_space<vmem>>, %arg9: memref<1x128xf32, #tpu.memory_space<vmem>>, %arg10: memref<128x128xi8, #tpu.memory_space<any>>, %arg11: memref<128x128xf32, #tpu.memory_space<vmem>>, %arg12: memref<128x128xi8, #tpu.memory_space<vmem>>, %arg13: memref<!tpu.dma_semaphore, #tpu.memory_space<semaphore_mem>>) attributes {dimension_semantics = [], scalar_prefetch = 0 : i64, scratch_operands = 2 : i64, tpu.core_type = #tpu.core_type<tc>} {
    tpu.enqueue_dma source(%arg10 : memref<128x128xi8, #tpu.memory_space<any>>) target(%arg12 : memref<128x128xi8, #tpu.memory_space<vmem>>) target_semaphore(%arg13 : memref<!tpu.dma_semaphore, #tpu.memory_space<semaphore_mem>>)
    %0 = tpu.iota {dimensions = array<i32: 0>} : vector<128x1xi32>
    %c8_i32 = arith.constant 8 : i32
    %1 = vector.broadcast %c8_i32 : i32 to vector<128x1xi32>
    %2 = arith.cmpi slt, %0, %1 : vector<128x1xi32>
    %3 = arith.extui %2 : vector<128x1xi1> to vector<128x1xi32>
    %4 = arith.sitofp %3 : vector<128x1xi32> to vector<128x1xf32>
    %c0 = arith.constant 0 : index
    %c0_0 = arith.constant 0 : index
    %5 = vector.load %arg0[%c0, %c0_0] : memref<128x128xbf16, #tpu.memory_space<vmem>>, vector<128x128xbf16>
    %c0_1 = arith.constant 0 : index
    %c0_2 = arith.constant 0 : index
    %6 = vector.load %arg1[%c0_1, %c0_2] : memref<128x128xbf16, #tpu.memory_space<vmem>>, vector<128x128xbf16>
    %cst = arith.constant dense<0.000000e+00> : vector<128x128xf32>
    %7 = tpu.matmul %5, %6, %cst {dimension_numbers = #tpu.dot_dimension_numbers<[1], [0], [0], [1], [0, 0, 1, 1], [], []>} : vector<128x128xbf16>, vector<128x128xbf16>, vector<128x128xf32> -> vector<128x128xf32>
    %c0_3 = arith.constant 0 : index
    %c0_4 = arith.constant 0 : index
    %8 = vector.load %arg2[%c0_3, %c0_4] : memref<1x128xf32, #tpu.memory_space<vmem>>, vector<1x128xf32>
    %9 = vector.broadcast %8 : vector<1x128xf32> to vector<128x128xf32>
    %10 = arith.addf %7, %9 : vector<128x128xf32>
    %cst_5 = arith.constant 0.000000e+00 : f32
    %11 = vector.broadcast %cst_5 : f32 to vector<128x128xf32>
    %12 = arith.maximumf %10, %11 : vector<128x128xf32>
    %13 = arith.truncf %12 : vector<128x128xf32> to vector<128x128xbf16>
    %c0_6 = arith.constant 0 : index
    %c0_7 = arith.constant 0 : index
    %14 = vector.load %arg3[%c0_6, %c0_7] : memref<128x128xbf16, #tpu.memory_space<vmem>>, vector<128x128xbf16>
    %cst_8 = arith.constant dense<0.000000e+00> : vector<128x128xf32>
    %15 = tpu.matmul %13, %14, %cst_8 {dimension_numbers = #tpu.dot_dimension_numbers<[1], [0], [0], [1], [0, 0, 1, 1], [], []>} : vector<128x128xbf16>, vector<128x128xbf16>, vector<128x128xf32> -> vector<128x128xf32>
    %c0_9 = arith.constant 0 : index
    %c0_10 = arith.constant 0 : index
    %16 = vector.load %arg4[%c0_9, %c0_10] : memref<1x128xf32, #tpu.memory_space<vmem>>, vector<1x128xf32>
    %17 = vector.broadcast %16 : vector<1x128xf32> to vector<128x128xf32>
    %18 = arith.addf %15, %17 : vector<128x128xf32>
    %19 = vector.broadcast %4 : vector<128x1xf32> to vector<128x128xf32>
    %20 = arith.mulf %18, %19 : vector<128x128xf32>
    tpu.wait_dma2 semaphore(%arg13 : memref<!tpu.dma_semaphore, #tpu.memory_space<semaphore_mem>>) src(%arg10 : memref<128x128xi8, #tpu.memory_space<any>>) dst(%arg12 : memref<128x128xi8, #tpu.memory_space<vmem>>)
    %21 = arith.truncf %20 : vector<128x128xf32> to vector<128x128xbf16>
    %c0_11 = arith.constant 0 : index
    %c0_12 = arith.constant 0 : index
    %c0_13 = arith.constant 0 : index
    %22 = vector.load %arg5[%c0_11, %c0_12, %c0_13] : memref<2x128x256xbf16, #tpu.memory_space<vmem>>, vector<1x128x256xbf16>
    %23 = vector.shape_cast %22 : vector<1x128x256xbf16> to vector<128x256xbf16>
    %cst_14 = arith.constant dense<0.000000e+00> : vector<128x256xf32>
    %24 = tpu.matmul %21, %23, %cst_14 {dimension_numbers = #tpu.dot_dimension_numbers<[1], [0], [0], [1], [0, 0, 1, 1], [], []>} : vector<128x128xbf16>, vector<128x256xbf16>, vector<128x256xf32> -> vector<128x256xf32>
    %25 = vector.extract_strided_slice %24 {offsets = [0, 0], sizes = [128, 128], strides = [1, 1]} : vector<128x256xf32> to vector<128x128xf32>
    %26 = vector.extract_strided_slice %24 {offsets = [0, 128], sizes = [128, 128], strides = [1, 1]} : vector<128x256xf32> to vector<128x128xf32>
    %c0_15 = arith.constant 0 : index
    %c0_16 = arith.constant 0 : index
    %27 = vector.load %arg12[%c0_15, %c0_16] : memref<128x128xi8, #tpu.memory_space<vmem>>, vector<128x128xi8>
    %28 = arith.sitofp %27 : vector<128x128xi8> to vector<128x128xbf16>
    %29 = arith.truncf %25 : vector<128x128xf32> to vector<128x128xbf16>
    %cst_17 = arith.constant dense<0.000000e+00> : vector<128x128xf32>
    %30 = tpu.matmul %28, %29, %cst_17 {dimension_numbers = #tpu.dot_dimension_numbers<[1], [0], [0], [1], [0, 0, 1, 1], [], []>} : vector<128x128xbf16>, vector<128x128xbf16>, vector<128x128xf32> -> vector<128x128xf32>
    %31 = arith.addf %30, %26 : vector<128x128xf32>
    %cst_18 = arith.constant 0.000000e+00 : f32
    %32 = vector.broadcast %cst_18 : f32 to vector<128x128xf32>
    %33 = arith.maximumf %31, %32 : vector<128x128xf32>
    %34 = arith.truncf %33 : vector<128x128xf32> to vector<128x128xbf16>
    %c1 = arith.constant 1 : index
    %c0_19 = arith.constant 0 : index
    %c0_20 = arith.constant 0 : index
    %35 = vector.load %arg5[%c1, %c0_19, %c0_20] : memref<2x128x256xbf16, #tpu.memory_space<vmem>>, vector<1x128x256xbf16>
    %36 = vector.shape_cast %35 : vector<1x128x256xbf16> to vector<128x256xbf16>
    %cst_21 = arith.constant dense<0.000000e+00> : vector<128x256xf32>
    %37 = tpu.matmul %34, %36, %cst_21 {dimension_numbers = #tpu.dot_dimension_numbers<[1], [0], [0], [1], [0, 0, 1, 1], [], []>} : vector<128x128xbf16>, vector<128x256xbf16>, vector<128x256xf32> -> vector<128x256xf32>
    %38 = vector.extract_strided_slice %37 {offsets = [0, 0], sizes = [128, 128], strides = [1, 1]} : vector<128x256xf32> to vector<128x128xf32>
    %39 = vector.extract_strided_slice %37 {offsets = [0, 128], sizes = [128, 128], strides = [1, 1]} : vector<128x256xf32> to vector<128x128xf32>
    %c0_22 = arith.constant 0 : index
    %c0_23 = arith.constant 0 : index
    %40 = vector.load %arg12[%c0_22, %c0_23] : memref<128x128xi8, #tpu.memory_space<vmem>>, vector<128x128xi8>
    %41 = arith.sitofp %40 : vector<128x128xi8> to vector<128x128xbf16>
    %42 = arith.truncf %38 : vector<128x128xf32> to vector<128x128xbf16>
    %cst_24 = arith.constant dense<0.000000e+00> : vector<128x128xf32>
    %43 = tpu.matmul %41, %42, %cst_24 {dimension_numbers = #tpu.dot_dimension_numbers<[1], [0], [0], [1], [0, 0, 1, 1], [], []>} : vector<128x128xbf16>, vector<128x128xbf16>, vector<128x128xf32> -> vector<128x128xf32>
    %44 = arith.addf %43, %39 : vector<128x128xf32>
    %cst_25 = arith.constant 0.000000e+00 : f32
    %45 = vector.broadcast %cst_25 : f32 to vector<128x128xf32>
    %46 = arith.maximumf %44, %45 : vector<128x128xf32>
    %47 = arith.truncf %46 : vector<128x128xf32> to vector<128x128xbf16>
    %c0_26 = arith.constant 0 : index
    %c0_27 = arith.constant 0 : index
    %48 = vector.load %arg6[%c0_26, %c0_27] : memref<128x128xbf16, #tpu.memory_space<vmem>>, vector<128x128xbf16>
    %cst_28 = arith.constant dense<0.000000e+00> : vector<128x128xf32>
    %49 = tpu.matmul %47, %48, %cst_28 {dimension_numbers = #tpu.dot_dimension_numbers<[1], [0], [0], [1], [0, 0, 1, 1], [], []>} : vector<128x128xbf16>, vector<128x128xbf16>, vector<128x128xf32> -> vector<128x128xf32>
    %c0_29 = arith.constant 0 : index
    %c0_30 = arith.constant 0 : index
    %50 = vector.load %arg7[%c0_29, %c0_30] : memref<1x128xf32, #tpu.memory_space<vmem>>, vector<1x128xf32>
    %51 = vector.broadcast %50 : vector<1x128xf32> to vector<128x128xf32>
    %52 = arith.addf %49, %51 : vector<128x128xf32>
    %cst_31 = arith.constant 0.000000e+00 : f32
    %53 = vector.broadcast %cst_31 : f32 to vector<128x128xf32>
    %54 = arith.maximumf %52, %53 : vector<128x128xf32>
    %55 = arith.truncf %54 : vector<128x128xf32> to vector<128x128xbf16>
    %c0_32 = arith.constant 0 : index
    %c0_33 = arith.constant 0 : index
    %56 = vector.load %arg8[%c0_32, %c0_33] : memref<128x128xbf16, #tpu.memory_space<vmem>>, vector<128x128xbf16>
    %cst_34 = arith.constant dense<0.000000e+00> : vector<128x128xf32>
    %57 = tpu.matmul %55, %56, %cst_34 {dimension_numbers = #tpu.dot_dimension_numbers<[1], [0], [0], [1], [0, 0, 1, 1], [], []>} : vector<128x128xbf16>, vector<128x128xbf16>, vector<128x128xf32> -> vector<128x128xf32>
    %c0_35 = arith.constant 0 : index
    %c0_36 = arith.constant 0 : index
    %58 = vector.load %arg9[%c0_35, %c0_36] : memref<1x128xf32, #tpu.memory_space<vmem>>, vector<1x128xf32>
    %59 = vector.broadcast %58 : vector<1x128xf32> to vector<128x128xf32>
    %60 = arith.addf %57, %59 : vector<128x128xf32>
    %c0_37 = arith.constant 0 : index
    %c0_38 = arith.constant 0 : index
    %61 = vector.load %arg11[%c0_37, %c0_38] : memref<128x128xf32, #tpu.memory_space<vmem>>, vector<128x128xf32>
    tpu.vector_store %arg11[%c0_37, %c0_38], %60 {strides = array<i32>} : memref<128x128xf32, #tpu.memory_space<vmem>>, vector<128x128xf32>,
    return
  }
}

</mosaic_0001>

<llo_original>
// kernel: tpu_custom_call.1
$region0: #{tpu_custom_call.1}
  #allocation0 [shape = 'u32[]', space=smem, size = 0x4, offset = 0x4, fixed_abs, tag = 'smem constant byte address 0x4 - core index']
  #allocation1 [shape = 'u32[144,128]{1,0:T(1,128)}', space=vmem, size = 0x12000, scoped, tag = 'internal scratch']
  #allocation2 [shape = 's8[128,128]{1,0:T(32,128)(4,1)}', space=vmem, size = 0x4000, scoped, tag = 'scratch operand']
  #allocation3 [shape = 's32[1]{0}', space=sflag, size = 0x4, scoped, tag = 'scratch operand']
  #allocation16 [shape = 's32[]', space=sflag, size = 0x4, offset = 0, fixed_abs, tag = 'sflag constant byte address 0x0 - dummy sync flag']
  %s0 = inlined_call_operand.hbm [shape: bf16[128,128], index: 0, kind: input, shape index: {}]
  %s1 = inlined_call_operand.hbm [shape: bf16[128,128], index: 1, kind: input, shape index: {}]
  %s2 = inlined_call_operand.vmem [shape: f32[1,128], index: 2, kind: input, shape index: {}]
  %s3 = inlined_call_operand.hbm [shape: bf16[128,128], index: 3, kind: input, shape index: {}]
  %s4 = inlined_call_operand.vmem [shape: f32[1,128], index: 4, kind: input, shape index: {}]
  %s5 = inlined_call_operand.hbm [shape: bf16[2,128,256], index: 5, kind: input, shape index: {}]
  %s6 = inlined_call_operand.hbm [shape: bf16[128,128], index: 6, kind: input, shape index: {}]
  %s7 = inlined_call_operand.vmem [shape: f32[1,128], index: 7, kind: input, shape index: {}]
  %s8 = inlined_call_operand.hbm [shape: bf16[128,128], index: 8, kind: input, shape index: {}]
  %s9 = inlined_call_operand.vmem [shape: f32[1,128], index: 9, kind: input, shape index: {}]
  %s10 = inlined_call_operand.vmem [shape: s8[128,128], index: 10, kind: input, shape index: {}]
  %s11 = inlined_call_operand.hbm [shape: f32[128,128], index: 11, kind: output, shape index: {}]
  %s12 = sld [smem:[#allocation0]]
  $region108: #{tpu_custom_call.1} parent=0
    _
  %s14 = ssub.s32 1, %s12
  %s15 = scalar_select 0, %s14, %s12
  $region1: #{tpu_custom_call.1} parent=0
    #allocation4 [shape = 'u8[32768]{0}', space=vmem, size = 0x8000, scoped, tag = 'input window, operand 0, single buffered']
    #allocation5 [shape = 's32[1]{0}', space=sflag, size = 0x4, scoped, tag = 'scoped memory for tpu_custom_call.1']
    #allocation6 [shape = 's32[1]{0}', space=sflag, size = 0x4, scoped, tag = 'scoped memory for tpu_custom_call.1']
    #allocation7 [shape = 'u8[32768]{0}', space=vmem, size = 0x8000, scoped, tag = 'input window, operand 1, single buffered']
    #allocation8 [shape = 's32[1]{0}', space=sflag, size = 0x4, scoped, tag = 'scoped memory for tpu_custom_call.1']
    #allocation9 [shape = 'u8[32768]{0}', space=vmem, size = 0x8000, scoped, tag = 'input window, operand 3, single buffered']
    #allocation10 [shape = 'u8[131072]{0}', space=vmem, size = 0x20000, scoped, tag = 'input window, operand 5, single buffered']
    #allocation11 [shape = 's32[1]{0}', space=sflag, size = 0x4, scoped, tag = 'scoped memory for tpu_custom_call.1']
    #allocation12 [shape = 'u8[32768]{0}', space=vmem, size = 0x8000, scoped, tag = 'input window, operand 6, single buffered']
    #allocation13 [shape = 'u8[32768]{0}', space=vmem, size = 0x8000, scoped, tag = 'input window, operand 8, single buffered']
    #allocation14 [shape = 's32[1]{0}', space=sflag, size = 0x4, scoped, tag = 'scoped memory for tpu_custom_call.1']
    #allocation15 [shape = 'u8[65536]{0}', space=vmem, size = 0x10000, scoped, tag = 'output window, operand 0, single buffered']
    %16 = vsyncpa [#allocation5], 0
    %17 = vsyncpa [#allocation8], 0
    %18 = vsyncpa [#allocation11], 0
    %19 = vsyncpa [#allocation14], 0
    %20 = vsyncpa [#allocation6], 0
    // Predicated region
    $region2: #{tpu_custom_call.1} parent=1 // pred_check
      _
    $region3: #{tpu_custom_call.1} parent=1 // pred_check_branch
      %22 = sbr.rel (0) target = $region5
    $region4: #{tpu_custom_call.1} parent=1 // pred_region
      %s24 = ssub.s32 1024, 1024
      %25 = vsyncadd [#allocation5], %s24
      %s26 = sshll.u32 [#allocation4], 4
      %s27 = int_to_ptr.vmem [resolvable:$true] %s26
      %32 = dma.hbm_to_vmem [thread:$0]  %s0, 1024, %s27, [#allocation5], 64, 64, 4
    $region5: #{tpu_custom_call.1} parent=1 // pred_fallthru
      _
    // Predicated region
    $region6: #{tpu_custom_call.1} parent=1 // pred_check
      _
    $region7: #{tpu_custom_call.1} parent=1 // pred_check_branch
      %34 = sbr.rel (0) target = $region9
    $region8: #{tpu_custom_call.1} parent=1 // pred_region
      %s36 = ssub.s32 1024, 1024
      %37 = vsyncadd [#allocation8], %s36
      %s38 = sshll.u32 [#allocation7], 4
      %s39 = int_to_ptr.vmem [resolvable:$true] %s38
      %44 = dma.hbm_to_vmem [thread:$0]  %s1, 1024, %s39, [#allocation8], 64, 64, 4
    $region9: #{tpu_custom_call.1} parent=1 // pred_fallthru
      _
    // Predicated region
    $region10: #{tpu_custom_call.1} parent=1 // pred_check
      _
    $region11: #{tpu_custom_call.1} parent=1 // pred_check_branch
      %46 = sbr.rel (0) target = $region13
    $region12: #{tpu_custom_call.1} parent=1 // pred_region
      _
    $region13: #{tpu_custom_call.1} parent=1 // pred_fallthru
      _
    // Predicated region
    $region14: #{tpu_custom_call.1} parent=1 // pred_check
      _
    $region15: #{tpu_custom_call.1} parent=1 // pred_check_branch
      %48 = sbr.rel (0) target = $region17
    $region16: #{tpu_custom_call.1} parent=1 // pred_region
      %s50 = ssub.s32 1024, 1024
      %51 = vsyncadd [#allocation8], %s50
      %s52 = sshll.u32 [#allocation9], 4
      %s53 = int_to_ptr.vmem [resolvable:$true] %s52
      %58 = dma.hbm_to_vmem [thread:$0]  %s3, 1024, %s53, [#allocation8], 64, 64, 4
    $region17: #{tpu_custom_call.1} parent=1 // pred_fallthru
      _
    // Predicated region
    $region18: #{tpu_custom_call.1} parent=1 // pred_check
      _
    $region19: #{tpu_custom_call.1} parent=1 // pred_check_branch
      %60 = sbr.rel (0) target = $region21
    $region20: #{tpu_custom_call.1} parent=1 // pred_region
      _
    $region21: #{tpu_custom_call.1} parent=1 // pred_fallthru
      _
    // Predicated region
    $region22: #{tpu_custom_call.1} parent=1 // pred_check
      _
    $region23: #{tpu_custom_call.1} parent=1 // pred_check_branch
      %62 = sbr.rel (0) target = $region25
    $region24: #{tpu_custom_call.1} parent=1 // pred_region
      %s64 = ssub.s32 4096, 4096
      %65 = vsyncadd [#allocation11], %s64
      %s66 = sshll.u32 [#allocation10], 4
      %s67 = int_to_ptr.vmem [resolvable:$true] %s66
      %72 = dma.hbm_to_vmem [thread:$0]  %s5, 4096, %s67, [#allocation11], 128, 128, 8
    $region25: #{tpu_custom_call.1} parent=1 // pred_fallthru
      _
    // Predicated region
    $region26: #{tpu_custom_call.1} parent=1 // pred_check
      _
    $region27: #{tpu_custom_call.1} parent=1 // pred_check_branch
      %74 = sbr.rel (0) target = $region29
    $region28: #{tpu_custom_call.1} parent=1 // pred_region
      %s76 = ssub.s32 1024, 1024
      %77 = vsyncadd [#allocation11], %s76
      %s78 = sshll.u32 [#allocation12], 4
      %s79 = int_to_ptr.vmem [resolvable:$true] %s78
      %84 = dma.hbm_to_vmem [thread:$0]  %s6, 1024, %s79, [#allocation11], 64, 64, 4
    $region29: #{tpu_custom_call.1} parent=1 // pred_fallthru
      _
    // Predicated region
    $region30: #{tpu_custom_call.1} parent=1 // pred_check
      _
    $region31: #{tpu_custom_call.1} parent=1 // pred_check_branch
      %86 = sbr.rel (0) target = $region33
    $region32: #{tpu_custom_call.1} parent=1 // pred_region
      _
    $region33: #{tpu_custom_call.1} parent=1 // pred_fallthru
      _
    // Predicated region
    $region34: #{tpu_custom_call.1} parent=1 // pred_check
      _
    $region35: #{tpu_custom_call.1} parent=1 // pred_check_branch
      %88 = sbr.rel (0) target = $region37
    $region36: #{tpu_custom_call.1} parent=1 // pred_region
      %s90 = ssub.s32 1024, 1024
      %91 = vsyncadd [#allocation14], %s90
      %s92 = sshll.u32 [#allocation13], 4
      %s93 = int_to_ptr.vmem [resolvable:$true] %s92
      %98 = dma.hbm_to_vmem [thread:$0]  %s8, 1024, %s93, [#allocation14], 64, 64, 4
    $region37: #{tpu_custom_call.1} parent=1 // pred_fallthru
      _
    // Predicated region
    $region38: #{tpu_custom_call.1} parent=1 // pred_check
      _
    $region39: #{tpu_custom_call.1} parent=1 // pred_check_branch
      %100 = sbr.rel (0) target = $region41
    $region40: #{tpu_custom_call.1} parent=1 // pred_region
      _
    $region41: #{tpu_custom_call.1} parent=1 // pred_fallthru
      _
    // Predicated region
    $region42: #{tpu_custom_call.1} parent=1 // pred_check
      _
    $region43: #{tpu_custom_call.1} parent=1 // pred_check_branch
      %102 = sbr.rel (0) target = $region45
    $region44: #{tpu_custom_call.1} parent=1 // pred_region
      %103 = dma.done [#allocation5], 1024
    $region45: #{tpu_custom_call.1} parent=1 // pred_fallthru
      _
    // Predicated region
    $region46: #{tpu_custom_call.1} parent=1 // pred_check
      _
    $region47: #{tpu_custom_call.1} parent=1 // pred_check_branch
      %105 = sbr.rel (0) target = $region49
    $region48: #{tpu_custom_call.1} parent=1 // pred_region
      %106 = dma.done [#allocation8], 1024
    $region49: #{tpu_custom_call.1} parent=1 // pred_fallthru
      _
    // Predicated region
    $region50: #{tpu_custom_call.1} parent=1 // pred_check
      _
    $region51: #{tpu_custom_call.1} parent=1 // pred_check_branch
      %108 = sbr.rel (0) target = $region53
    $region52: #{tpu_custom_call.1} parent=1 // pred_region
      %109 = dma.done [#allocation8], 1024
    $region53: #{tpu_custom_call.1} parent=1 // pred_fallthru
      _
    // Predicated region
    $region54: #{tpu_custom_call.1} parent=1 // pred_check
      _
    $region55: #{tpu_custom_call.1} parent=1 // pred_check_branch
      %111 = sbr.rel (0) target = $region57
    $region56: #{tpu_custom_call.1} parent=1 // pred_region
      %112 = dma.done [#allocation11], 4096
    $region57: #{tpu_custom_call.1} parent=1 // pred_fallthru
      _
    // Predicated region
    $region58: #{tpu_custom_call.1} parent=1 // pred_check
      _
    $region59: #{tpu_custom_call.1} parent=1 // pred_check_branch
      %114 = sbr.rel (0) target = $region61
    $region60: #{tpu_custom_call.1} parent=1 // pred_region
      %115 = dma.done [#allocation11], 1024
    $region61: #{tpu_custom_call.1} parent=1 // pred_fallthru
      _
    // Predicated region
    $region62: #{tpu_custom_call.1} parent=1 // pred_check
      _
    $region63: #{tpu_custom_call.1} parent=1 // pred_check_branch
      %117 = sbr.rel (0) target = $region65
    $region64: #{tpu_custom_call.1} parent=1 // pred_region
      %118 = dma.done [#allocation14], 1024
    $region65: #{tpu_custom_call.1} parent=1 // pred_fallthru
      _
    %p121 = scmp.lt.u32.totalorder 32, 8
    %p122 = pneg %p121
    // Predicated region
    $region66: #{tpu_custom_call.1} parent=1 // pred_check
      _
    $region67: #{tpu_custom_call.1} parent=1 // pred_check_branch
      %124 = sbr.rel (%p121) target = $region69
    $region68: #{tpu_custom_call.1} parent=1 // pred_region
      %s139 = sand.u32 32, 7
      %p140 = scmp.eq.s32.totalorder %s139, 0
      // Predicated region
      $region81: #{tpu_custom_call.1} parent=68 // pred_check
        %p141 = pneg %p140
      $region82: #{tpu_custom_call.1} parent=68 // pred_check_branch
        %143 = sbr.rel (%p141) target = $region84
      $region83: #{tpu_custom_call.1} parent=68 // pred_region
        loop: start=0, step=1, limit=1
        $region85: #{tpu_custom_call.1} parent=83 // loop_pre_header
          _
        $region86: #{tpu_custom_call.1} parent=83 // loop_header
          %s145 = sphi 0, %s149
          %p146 = scmp.ge.s32.totalorder %s145, 1
          %s150 = sphi %s10, %s10
          %s151 = sphi [#allocation2], [#allocation2]
        $region87: #{tpu_custom_call.1} parent=83 // loop_header_branch
          %148 = sbr.rel (%p146) target = $region91
        $region88: #{tpu_custom_call.1} parent=83 // loop_body
          %v152 = vld [vmem:[%s150] sm:$0xff]
          %153 = vst [vmem:[%s151] sm:$0xff] %v152
          %v154 = vld [vmem:[%s150 + $0x8] sm:$0xff]
          %155 = vst [vmem:[%s151 + $0x8] sm:$0xff] %v154
          %v156 = vld [vmem:[%s150 + $0x10] sm:$0xff]
          %157 = vst [vmem:[%s151 + $0x10] sm:$0xff] %v156
          %v158 = vld [vmem:[%s150 + $0x18] sm:$0xff]
          %159 = vst [vmem:[%s151 + $0x18] sm:$0xff] %v158
        $region89: #{tpu_custom_call.1} parent=83 // loop_footer
          %s149 = sadd.s32 1, %s145
        $region90: #{tpu_custom_call.1} parent=83 // loop_footer_branch
          %144 = sbr.rel target = $region86
        $region91: #{tpu_custom_call.1} parent=83 // loop_exit
          _
      $region84: #{tpu_custom_call.1} parent=68 // pred_fallthru
        _
      %p160 = pneg %p140
      // Predicated region
      $region92: #{tpu_custom_call.1} parent=68 // pred_check
        _
      $region93: #{tpu_custom_call.1} parent=68 // pred_check_branch
        %162 = sbr.rel (%p140) target = $region95
      $region94: #{tpu_custom_call.1} parent=68 // pred_region
        %s163 = sand.u32 32, 7
      $region95: #{tpu_custom_call.1} parent=68 // pred_fallthru
        _
    $region69: #{tpu_custom_call.1} parent=1 // pred_fallthru
      _
    // Predicated region
    $region70: #{tpu_custom_call.1} parent=1 // pred_check
      %p125 = pneg %p121
    $region71: #{tpu_custom_call.1} parent=1 // pred_check_branch
      %127 = sbr.rel (%p125) target = $region73
    $region72: #{tpu_custom_call.1} parent=1 // pred_region
      %s128 = sshllo.u32 0, 32
      loop: start=0, step=1, limit=1
      $region74: #{tpu_custom_call.1} parent=72 // loop_pre_header
        _
      $region75: #{tpu_custom_call.1} parent=72 // loop_header
        %s130 = sphi 0, %s134
        %p131 = scmp.ge.s32.totalorder %s130, 1
        %s135 = sphi %s10, %s10
        %s136 = sphi [#allocation2], [#allocation2]
      $region76: #{tpu_custom_call.1} parent=72 // loop_header_branch
        %133 = sbr.rel (%p131) target = $region80
      $region77: #{tpu_custom_call.1} parent=72 // loop_body
        %v137 = vld [vmem:[%s135] sm:%s128]
        %138 = vst [vmem:[%s136] sm:%s128] %v137
      $region78: #{tpu_custom_call.1} parent=72 // loop_footer
        %s134 = sadd.s32 1, %s130
      $region79: #{tpu_custom_call.1} parent=72 // loop_footer_branch
        %129 = sbr.rel target = $region75
      $region80: #{tpu_custom_call.1} parent=72 // loop_exit
        _
    $region73: #{tpu_custom_call.1} parent=1 // pred_fallthru
      _
    // Predicated region
    $region96: #{tpu_custom_call.1} parent=1 // pred_check
      _
    $region97: #{tpu_custom_call.1} parent=1 // pred_check_branch
      %166 = sbr.rel (0) target = $region99
    $region98: #{tpu_custom_call.1} parent=1 // pred_region
      %167 = vsyncadd [#allocation3], 512
    $region99: #{tpu_custom_call.1} parent=1 // pred_fallthru
      _
    %v168 = vlaneseq
    %v169 = vshrl.u32 %v168, 7
    %v170 = vadd.s32 %v169, 8
    %v171 = vadd.s32 %v169, 16
    %v172 = vadd.s32 %v169, 24
    %v173 = vadd.s32 %v169, 32
    %v174 = vadd.s32 %v169, 40
    %v175 = vadd.s32 %v169, 48
    %v176 = vadd.s32 %v169, 56
    %v177 = vadd.s32 %v169, 64
    %v178 = vadd.s32 %v169, 72
    %v179 = vadd.s32 %v169, 80
    %v180 = vadd.s32 %v169, 88
    %v181 = vadd.s32 %v169, 96
    %v182 = vadd.s32 %v169, 104
    %v183 = vadd.s32 %v169, 112
    %v184 = vadd.s32 %v169, 120
    %vm185 = vcmp.lt.s32.totalorder %v169, 8
    %vm186 = vcmp.lt.s32.totalorder %v170, 8
    %vm187 = vcmp.lt.s32.totalorder %v171, 8
    %vm188 = vcmp.lt.s32.totalorder %v172, 8
    %vm189 = vcmp.lt.s32.totalorder %v173, 8
    %vm190 = vcmp.lt.s32.totalorder %v174, 8
    %vm191 = vcmp.lt.s32.totalorder %v175, 8
    %vm192 = vcmp.lt.s32.totalorder %v176, 8
    %vm193 = vcmp.lt.s32.totalorder %v177, 8
    %vm194 = vcmp.lt.s32.totalorder %v178, 8
    %vm195 = vcmp.lt.s32.totalorder %v179, 8
    %vm196 = vcmp.lt.s32.totalorder %v180, 8
    %vm197 = vcmp.lt.s32.totalorder %v181, 8
    %vm198 = vcmp.lt.s32.totalorder %v182, 8
    %vm199 = vcmp.lt.s32.totalorder %v183, 8
    %vm200 = vcmp.lt.s32.totalorder %v184, 8
    %v201 = vsel %vm185, 1, 0
    %v202 = vsel %vm186, 1, 0
    %v203 = vsel %vm187, 1, 0
    %v204 = vsel %vm188, 1, 0
    %v205 = vsel %vm189, 1, 0
    %v206 = vsel %vm190, 1, 0
    %v207 = vsel %vm191, 1, 0
    %v208 = vsel %vm192, 1, 0
    %v209 = vsel %vm193, 1, 0
    %v210 = vsel %vm194, 1, 0
    %v211 = vsel %vm195, 1, 0
    %v212 = vsel %vm196, 1, 0
    %v213 = vsel %vm197, 1, 0
    %v214 = vsel %vm198, 1, 0
    %v215 = vsel %vm199, 1, 0
    %v216 = vsel %vm200, 1, 0
    %v217 = vcvt.s32.f32 %v201
    %v218 = vcvt.s32.f32 %v202
    %v219 = vcvt.s32.f32 %v203
    %v220 = vcvt.s32.f32 %v204
    %v221 = vcvt.s32.f32 %v205
    %v222 = vcvt.s32.f32 %v206
    %v223 = vcvt.s32.f32 %v207
    %v224 = vcvt.s32.f32 %v208
    %v225 = vcvt.s32.f32 %v209
    %v226 = vcvt.s32.f32 %v210
    %v227 = vcvt.s32.f32 %v211
    %v228 = vcvt.s32.f32 %v212
    %v229 = vcvt.s32.f32 %v213
    %v230 = vcvt.s32.f32 %v214
    %v231 = vcvt.s32.f32 %v215
    %v232 = vcvt.s32.f32 %v216
    %v233 = vld [vmem:[#allocation4] sm:$0xf]
    %v234 = vld [vmem:[#allocation4 + $0x4] sm:$0xf]
    %v235 = vld [vmem:[#allocation4 + $0x8] sm:$0xf]
    %v236 = vld [vmem:[#allocation4 + $0xc] sm:$0xf]
    %v237 = vld [vmem:[#allocation4 + $0x10] sm:$0xf]
    %v238 = vld [vmem:[#allocation4 + $0x14] sm:$0xf]
    %v239 = vld [vmem:[#allocation4 + $0x18] sm:$0xf]
    %v240 = vld [vmem:[#allocation4 + $0x1c] sm:$0xf]
    %v241 = vld [vmem:[#allocation4 + $0x20] sm:$0xf]
    %v242 = vld [vmem:[#allocation4 + $0x24] sm:$0xf]
    %v243 = vld [vmem:[#allocation4 + $0x28] sm:$0xf]
    %v244 = vld [vmem:[#allocation4 + $0x2c] sm:$0xf]
    %v245 = vld [vmem:[#allocation4 + $0x30] sm:$0xf]
    %v246 = vld [vmem:[#allocation4 + $0x34] sm:$0xf]
    %v247 = vld [vmem:[#allocation4 + $0x38] sm:$0xf]
    %v248 = vld [vmem:[#allocation4 + $0x3c] sm:$0xf]
    %v249 = vld [vmem:[#allocation7] sm:$0xf]
    %v250 = vld [vmem:[#allocation7 + $0x4] sm:$0xf]
    %v251 = vld [vmem:[#allocation7 + $0x8] sm:$0xf]
    %v252 = vld [vmem:[#allocation7 + $0xc] sm:$0xf]
    %v253 = vld [vmem:[#allocation7 + $0x10] sm:$0xf]
    %v254 = vld [vmem:[#allocation7 + $0x14] sm:$0xf]
    %v255 = vld [vmem:[#allocation7 + $0x18] sm:$0xf]
    %v256 = vld [vmem:[#allocation7 + $0x1c] sm:$0xf]
    %v257 = vld [vmem:[#allocation7 + $0x20] sm:$0xf]
    %v258 = vld [vmem:[#allocation7 + $0x24] sm:$0xf]
    %v259 = vld [vmem:[#allocation7 + $0x28] sm:$0xf]
    %v260 = vld [vmem:[#allocation7 + $0x2c] sm:$0xf]
    %v261 = vld [vmem:[#allocation7 + $0x30] sm:$0xf]
    %v262 = vld [vmem:[#allocation7 + $0x34] sm:$0xf]
    %v263 = vld [vmem:[#allocation7 + $0x38] sm:$0xf]
    %v264 = vld [vmem:[#allocation7 + $0x3c] sm:$0xf]
    %v265 = vld [vmem:[%s2] sm:$0x1]
    %v267 = vlaneseq
    %v268 = vshrl.u32 %v267, 7
    %v269 = vsub.s32 0, %v268
    %v270 = vrot.slane %v265, %v269
    %v288 = vunpack.c.l.b16 %v233
    %v289 = vunpack.c.l.b16 %v234
    %v290 = vunpack.c.l.b16 %v235
    %v291 = vunpack.c.l.b16 %v236
    %v292 = vunpack.c.l.b16 %v237
    %v293 = vunpack.c.l.b16 %v238
    %v294 = vunpack.c.l.b16 %v239
    %v295 = vunpack.c.l.b16 %v240
    %v296 = vunpack.c.l.b16 %v241
    %v297 = vunpack.c.l.b16 %v242
    %v298 = vunpack.c.l.b16 %v243
    %v299 = vunpack.c.l.b16 %v244
    %v300 = vunpack.c.l.b16 %v245
    %v301 = vunpack.c.l.b16 %v246
    %v302 = vunpack.c.l.b16 %v247
    %v303 = vunpack.c.l.b16 %v248
    %v304 = vpack.c.b16 %v289, %v288
    %v305 = vpack.c.b16 %v291, %v290
    %v306 = vpack.c.b16 %v293, %v292
    %v307 = vpack.c.b16 %v295, %v294
    %v308 = vpack.c.b16 %v297, %v296
    %v309 = vpack.c.b16 %v299, %v298
    %v310 = vpack.c.b16 %v301, %v300
    %v311 = vpack.c.b16 %v303, %v302
    %v336 = vunpack.c.l.b16 %v249
    %v337 = vunpack.c.l.b16 %v250
    %v338 = vunpack.c.l.b16 %v251
    %v339 = vunpack.c.l.b16 %v252
    %v340 = vunpack.c.l.b16 %v253
    %v341 = vunpack.c.l.b16 %v254
    %v342 = vunpack.c.l.b16 %v255
    %v343 = vunpack.c.l.b16 %v256
    %v344 = vunpack.c.l.b16 %v257
    %v345 = vunpack.c.l.b16 %v258
    %v346 = vunpack.c.l.b16 %v259
    %v347 = vunpack.c.l.b16 %v260
    %v348 = vunpack.c.l.b16 %v261
    %v349 = vunpack.c.l.b16 %v262
    %v350 = vunpack.c.l.b16 %v263
    %v351 = vunpack.c.l.b16 %v264
    %v352 = vpack.c.b16 %v337, %v336
    %v353 = vpack.c.b16 %v339, %v338
    %v354 = vpack.c.b16 %v341, %v340
    %v355 = vpack.c.b16 %v343, %v342
    %v356 = vpack.c.b16 %v345, %v344
    %v357 = vpack.c.b16 %v347, %v346
    %v358 = vpack.c.b16 %v349, %v348
    %v359 = vpack.c.b16 %v351, %v350
    %368 = vmatprep.subr.bf16.mxu0 0
    %369 = vmatpush1.bf16.msra.mxu0 %v352
    %370 = vmatprep.subr.bf16.mxu0 0
    %371 = vmatpush1.bf16.msra.mxu0 %v353
    %372 = vmatprep.subr.bf16.mxu0 0
    %373 = vmatpush1.bf16.msra.mxu0 %v354
    %374 = vmatprep.subr.bf16.mxu0 0
    %375 = vmatpush1.bf16.msra.mxu0 %v355
    %376 = vmatprep.subr.bf16.mxu0 0
    %377 = vmatpush1.bf16.msra.mxu0 %v356
    %378 = vmatprep.subr.bf16.mxu0 0
    %379 = vmatpush1.bf16.msra.mxu0 %v357
    %380 = vmatprep.subr.bf16.mxu0 0
    %381 = vmatpush1.bf16.msra.mxu0 %v358
    %382 = vmatprep.subr.bf16.mxu0 0
    %383 = vmatpush1.bf16.msra.mxu0 %v359
    %384 = vmatprep.subr.bf16.mxu0 0
    %385 = vmatpush1.bf16.msra.mxu0 0
    %386 = vmatprep.subr.bf16.mxu0 0
    %387 = vmatpush1.bf16.msra.mxu0 0
    %388 = vmatprep.subr.bf16.mxu0 0
    %389 = vmatpush1.bf16.msra.mxu0 0
    %390 = vmatprep.subr.bf16.mxu0 0
    %391 = vmatpush1.bf16.msra.mxu0 0
    %392 = vmatprep.subr.bf16.mxu0 0
    %393 = vmatpush1.bf16.msra.mxu0 0
    %394 = vmatprep.subr.bf16.mxu0 0
    %395 = vmatpush1.bf16.msra.mxu0 0
    %396 = vmatprep.subr.bf16.mxu0 0
    %397 = vmatpush1.bf16.msra.mxu0 0
    %398 = vmatprep.subr.bf16.mxu0 0
    %399 = vmatpush1.bf16.msra.mxu0 0
    %400 = vmatprep.mubr.bf16.mxu0 0
    %401 = vmatmul.mubr.bf16.gmra.mrb[0].mxu0 %v304
    %v402 = vpop.f32.mrb[0].mxu0
    %v403 = vadd.f32 %v270, %v402
    %v404 = vpop.f32.mrb[0].mxu0
    %v405 = vpop.f32.mrb[0].mxu0
    %v406 = vadd.f32 %v270, %v405
    %v407 = vpop.f32.mrb[0].mxu0
    %408 = vmatprep.mubr.bf16.mxu0 0
    %409 = vmatmul.mubr.bf16.gmra.mrb[0].mxu0 %v305
    %v410 = vpop.f32.mrb[0].mxu0
    %v411 = vadd.f32 %v270, %v410
    %v412 = vpop.f32.mrb[0].mxu0
    %v413 = vpop.f32.mrb[0].mxu0
    %v414 = vadd.f32 %v270, %v413
    %v415 = vpop.f32.mrb[0].mxu0
    %416 = vmatprep.mubr.bf16.mxu0 0
    %417 = vmatmul.mubr.bf16.gmra.mrb[0].mxu0 %v306
    %v418 = vpop.f32.mrb[0].mxu0
    %v419 = vadd.f32 %v270, %v418
    %v420 = vpop.f32.mrb[0].mxu0
    %v421 = vpop.f32.mrb[0].mxu0
    %v422 = vadd.f32 %v270, %v421
    %v423 = vpop.f32.mrb[0].mxu0
    %424 = vmatprep.mubr.bf16.mxu0 0
    %425 = vmatmul.mubr.bf16.gmra.mrb[0].mxu0 %v307
    %v426 = vpop.f32.mrb[0].mxu0
    %v427 = vadd.f32 %v270, %v426
    %v428 = vpop.f32.mrb[0].mxu0
    %v429 = vpop.f32.mrb[0].mxu0
    %v430 = vadd.f32 %v270, %v429
    %v431 = vpop.f32.mrb[0].mxu0
    %432 = vmatprep.mubr.bf16.mxu0 0
    %433 = vmatmul.mubr.bf16.gmra.mrb[0].mxu0 %v308
    %v434 = vpop.f32.mrb[0].mxu0
    %v435 = vadd.f32 %v270, %v434
    %v436 = vpop.f32.mrb[0].mxu0
    %v437 = vpop.f32.mrb[0].mxu0
    %v438 = vadd.f32 %v270, %v437
    %v439 = vpop.f32.mrb[0].mxu0
    %440 = vmatprep.mubr.bf16.mxu0 0
    %441 = vmatmul.mubr.bf16.gmra.mrb[0].mxu0 %v309
    %v442 = vpop.f32.mrb[0].mxu0
    %v443 = vadd.f32 %v270, %v442
    %v444 = vpop.f32.mrb[0].mxu0
    %v445 = vpop.f32.mrb[0].mxu0
    %v446 = vadd.f32 %v270, %v445
    %v447 = vpop.f32.mrb[0].mxu0
    %448 = vmatprep.mubr.bf16.mxu0 0
    %449 = vmatmul.mubr.bf16.gmra.mrb[0].mxu0 %v310
    %v450 = vpop.f32.mrb[0].mxu0
    %v451 = vadd.f32 %v270, %v450
    %v452 = vpop.f32.mrb[0].mxu0
    %v453 = vpop.f32.mrb[0].mxu0
    %v454 = vadd.f32 %v270, %v453
    %v455 = vpop.f32.mrb[0].mxu0
    %456 = vmatprep.mubr.bf16.mxu0 0
    %457 = vmatmul.mubr.bf16.gmra.mrb[0].mxu0 %v311
    %v458 = vpop.f32.mrb[0].mxu0
    %v459 = vadd.f32 %v270, %v458
    %v460 = vpop.f32.mrb[0].mxu0
    %v461 = vpop.f32.mrb[0].mxu0
    %v462 = vadd.f32 %v270, %v461
    %v463 = vpop.f32.mrb[0].mxu0
    %464 = vdwg.mxu0
    %v465 = vmax.f32 %v403, 0.0
    %v466 = vmax.f32 %v406, 0.0
    %v467 = vmax.f32 %v411, 0.0
    %v468 = vmax.f32 %v414, 0.0
    %v469 = vmax.f32 %v419, 0.0
    %v470 = vmax.f32 %v422, 0.0
    %v471 = vmax.f32 %v427, 0.0
    %v472 = vmax.f32 %v430, 0.0
    %v473 = vmax.f32 %v435, 0.0
    %v474 = vmax.f32 %v438, 0.0
    %v475 = vmax.f32 %v443, 0.0
    %v476 = vmax.f32 %v446, 0.0
    %v477 = vmax.f32 %v451, 0.0
    %v478 = vmax.f32 %v454, 0.0
    %v479 = vmax.f32 %v459, 0.0
    %v480 = vmax.f32 %v462, 0.0
    %v481 = vpack.c.bf16 %v466, %v465
    %v482 = vpack.c.bf16 %v468, %v467
    %v483 = vpack.c.bf16 %v470, %v469
    %v484 = vpack.c.bf16 %v472, %v471
    %v485 = vpack.c.bf16 %v474, %v473
    %v486 = vpack.c.bf16 %v476, %v475
    %v487 = vpack.c.bf16 %v478, %v477
    %v488 = vpack.c.bf16 %v480, %v479
    %v489 = vld [vmem:[#allocation9] sm:$0xf]
    %v490 = vld [vmem:[#allocation9 + $0x4] sm:$0xf]
    %v491 = vld [vmem:[#allocation9 + $0x8] sm:$0xf]
    %v492 = vld [vmem:[#allocation9 + $0xc] sm:$0xf]
    %v493 = vld [vmem:[#allocation9 + $0x10] sm:$0xf]
    %v494 = vld [vmem:[#allocation9 + $0x14] sm:$0xf]
    %v495 = vld [vmem:[#allocation9 + $0x18] sm:$0xf]
    %v496 = vld [vmem:[#allocation9 + $0x1c] sm:$0xf]
    %v497 = vld [vmem:[#allocation9 + $0x20] sm:$0xf]
    %v498 = vld [vmem:[#allocation9 + $0x24] sm:$0xf]
    %v499 = vld [vmem:[#allocation9 + $0x28] sm:$0xf]
    %v500 = vld [vmem:[#allocation9 + $0x2c] sm:$0xf]
    %v501 = vld [vmem:[#allocation9 + $0x30] sm:$0xf]
    %v502 = vld [vmem:[#allocation9 + $0x34] sm:$0xf]
    %v503 = vld [vmem:[#allocation9 + $0x38] sm:$0xf]
    %v504 = vld [vmem:[#allocation9 + $0x3c] sm:$0xf]
    %v505 = vld [vmem:[%s4] sm:$0x1]
    %v507 = vlaneseq
    %v508 = vshrl.u32 %v507, 7
    %v509 = vsub.s32 0, %v508
    %v510 = vrot.slane %v505, %v509
    %v528 = vunpack.c.l.b16 %v489
    %v529 = vunpack.c.l.b16 %v490
    %v530 = vunpack.c.l.b16 %v491
    %v531 = vunpack.c.l.b16 %v492
    %v532 = vunpack.c.l.b16 %v493
    %v533 = vunpack.c.l.b16 %v494
    %v534 = vunpack.c.l.b16 %v495
    %v535 = vunpack.c.l.b16 %v496
    %v536 = vunpack.c.l.b16 %v497
    %v537 = vunpack.c.l.b16 %v498
    %v538 = vunpack.c.l.b16 %v499
    %v539 = vunpack.c.l.b16 %v500
    %v540 = vunpack.c.l.b16 %v501
    %v541 = vunpack.c.l.b16 %v502
    %v542 = vunpack.c.l.b16 %v503
    %v543 = vunpack.c.l.b16 %v504
    %v544 = vpack.c.b16 %v529, %v528
    %v545 = vpack.c.b16 %v531, %v530
    %v546 = vpack.c.b16 %v533, %v532
    %v547 = vpack.c.b16 %v535, %v534
    %v548 = vpack.c.b16 %v537, %v536
    %v549 = vpack.c.b16 %v539, %v538
    %v550 = vpack.c.b16 %v541, %v540
    %v551 = vpack.c.b16 %v543, %v542
    %560 = vmatprep.subr.bf16.mxu0 0
    %561 = vmatpush1.bf16.msra.mxu0 %v544
    %562 = vmatprep.subr.bf16.mxu0 0
    %563 = vmatpush1.bf16.msra.mxu0 %v545
    %564 = vmatprep.subr.bf16.mxu0 0
    %565 = vmatpush1.bf16.msra.mxu0 %v546
    %566 = vmatprep.subr.bf16.mxu0 0
    %567 = vmatpush1.bf16.msra.mxu0 %v547
    %568 = vmatprep.subr.bf16.mxu0 0
    %569 = vmatpush1.bf16.msra.mxu0 %v548
    %570 = vmatprep.subr.bf16.mxu0 0
    %571 = vmatpush1.bf16.msra.mxu0 %v549
    %572 = vmatprep.subr.bf16.mxu0 0
    %573 = vmatpush1.bf16.msra.mxu0 %v550
    %574 = vmatprep.subr.bf16.mxu0 0
    %575 = vmatpush1.bf16.msra.mxu0 %v551
    %576 = vmatprep.subr.bf16.mxu0 0
    %577 = vmatpush1.bf16.msra.mxu0 0
    %578 = vmatprep.subr.bf16.mxu0 0
    %579 = vmatpush1.bf16.msra.mxu0 0
    %580 = vmatprep.subr.bf16.mxu0 0
    %581 = vmatpush1.bf16.msra.mxu0 0
    %582 = vmatprep.subr.bf16.mxu0 0
    %583 = vmatpush1.bf16.msra.mxu0 0
    %584 = vmatprep.subr.bf16.mxu0 0
    %585 = vmatpush1.bf16.msra.mxu0 0
    %586 = vmatprep.subr.bf16.mxu0 0
    %587 = vmatpush1.bf16.msra.mxu0 0
    %588 = vmatprep.subr.bf16.mxu0 0
    %589 = vmatpush1.bf16.msra.mxu0 0
    %590 = vmatprep.subr.bf16.mxu0 0
    %591 = vmatpush1.bf16.msra.mxu0 0
    %592 = vmatprep.mubr.bf16.mxu0 0
    %593 = vmatmul.mubr.bf16.gmra.mrb[0].mxu0 %v481
    %v594 = vpop.f32.mrb[0].mxu0
    %v595 = vadd.f32 %v510, %v594
    %v596 = vpop.f32.mrb[0].mxu0
    %v597 = vpop.f32.mrb[0].mxu0
    %v598 = vadd.f32 %v510, %v597
    %v599 = vpop.f32.mrb[0].mxu0
    %600 = vmatprep.mubr.bf16.mxu0 0
    %601 = vmatmul.mubr.bf16.gmra.mrb[0].mxu0 %v482
    %v602 = vpop.f32.mrb[0].mxu0
    %v603 = vadd.f32 %v510, %v602
    %v604 = vpop.f32.mrb[0].mxu0
    %v605 = vpop.f32.mrb[0].mxu0
    %v606 = vadd.f32 %v510, %v605
    %v607 = vpop.f32.mrb[0].mxu0
    %608 = vmatprep.mubr.bf16.mxu0 0
    %609 = vmatmul.mubr.bf16.gmra.mrb[0].mxu0 %v483
    %v610 = vpop.f32.mrb[0].mxu0
    %v611 = vadd.f32 %v510, %v610
    %v612 = vpop.f32.mrb[0].mxu0
    %v613 = vpop.f32.mrb[0].mxu0
    %v614 = vadd.f32 %v510, %v613
    %v615 = vpop.f32.mrb[0].mxu0
    %616 = vmatprep.mubr.bf16.mxu0 0
    %617 = vmatmul.mubr.bf16.gmra.mrb[0].mxu0 %v484
    %v618 = vpop.f32.mrb[0].mxu0
    %v619 = vadd.f32 %v510, %v618
    %v620 = vpop.f32.mrb[0].mxu0
    %v621 = vpop.f32.mrb[0].mxu0
    %v622 = vadd.f32 %v510, %v621
    %v623 = vpop.f32.mrb[0].mxu0
    %624 = vmatprep.mubr.bf16.mxu0 0
    %625 = vmatmul.mubr.bf16.gmra.mrb[0].mxu0 %v485
    %v626 = vpop.f32.mrb[0].mxu0
    %v627 = vadd.f32 %v510, %v626
    %v628 = vpop.f32.mrb[0].mxu0
    %v629 = vpop.f32.mrb[0].mxu0
    %v630 = vadd.f32 %v510, %v629
    %v631 = vpop.f32.mrb[0].mxu0
    %632 = vmatprep.mubr.bf16.mxu0 0
    %633 = vmatmul.mubr.bf16.gmra.mrb[0].mxu0 %v486
    %v634 = vpop.f32.mrb[0].mxu0
    %v635 = vadd.f32 %v510, %v634
    %v636 = vpop.f32.mrb[0].mxu0
    %v637 = vpop.f32.mrb[0].mxu0
    %v638 = vadd.f32 %v510, %v637
    %v639 = vpop.f32.mrb[0].mxu0
    %640 = vmatprep.mubr.bf16.mxu0 0
    %641 = vmatmul.mubr.bf16.gmra.mrb[0].mxu0 %v487
    %v642 = vpop.f32.mrb[0].mxu0
    %v643 = vadd.f32 %v510, %v642
    %v644 = vpop.f32.mrb[0].mxu0
    %v645 = vpop.f32.mrb[0].mxu0
    %v646 = vadd.f32 %v510, %v645
    %v647 = vpop.f32.mrb[0].mxu0
    %648 = vmatprep.mubr.bf16.mxu0 0
    %649 = vmatmul.mubr.bf16.gmra.mrb[0].mxu0 %v488
    %v650 = vpop.f32.mrb[0].mxu0
    %v651 = vadd.f32 %v510, %v650
    %v652 = vpop.f32.mrb[0].mxu0
    %v653 = vpop.f32.mrb[0].mxu0
    %v654 = vadd.f32 %v510, %v653
    %v655 = vpop.f32.mrb[0].mxu0
    %656 = vdwg.mxu0
    %v657 = vmul.f32 %v595, %v217
    %v658 = vmul.f32 %v598, %v218
    %v659 = vmul.f32 %v603, %v219
    %v660 = vmul.f32 %v606, %v220
    %v661 = vmul.f32 %v611, %v221
    %v662 = vmul.f32 %v614, %v222
    %v663 = vmul.f32 %v619, %v223
    %v664 = vmul.f32 %v622, %v224
    %v665 = vmul.f32 %v627, %v225
    %v666 = vmul.f32 %v630, %v226
    %v667 = vmul.f32 %v635, %v227
    %v668 = vmul.f32 %v638, %v228
    %v669 = vmul.f32 %v643, %v229
    %v670 = vmul.f32 %v646, %v230
    %v671 = vmul.f32 %v651, %v231
    %v672 = vmul.f32 %v654, %v232
    %s673 = smul.u32 2, 16
    %s674 = smul.u32 %s673, 1
    %s675 = sshll.u32 %s674, 4
    %676 = dma.done [#allocation3], %s675
    %v677 = vpack.c.bf16 %v658, %v657
    %v678 = vpack.c.bf16 %v660, %v659
    %v679 = vpack.c.bf16 %v662, %v661
    %v680 = vpack.c.bf16 %v664, %v663
    %v681 = vpack.c.bf16 %v666, %v665
    %v682 = vpack.c.bf16 %v668, %v667
    %v683 = vpack.c.bf16 %v670, %v669
    %v684 = vpack.c.bf16 %v672, %v671
    %v685 = vld [vmem:[#allocation10] sm:$0xff]
    %v686 = vld [vmem:[#allocation10 + $0x8] sm:$0xff]
    %v687 = vld [vmem:[#allocation10 + $0x10] sm:$0xff]
    %v688 = vld [vmem:[#allocation10 + $0x18] sm:$0xff]
    %v689 = vld [vmem:[#allocation10 + $0x20] sm:$0xff]
    %v690 = vld [vmem:[#allocation10 + $0x28] sm:$0xff]
    %v691 = vld [vmem:[#allocation10 + $0x30] sm:$0xff]
    %v692 = vld [vmem:[#allocation10 + $0x38] sm:$0xff]
    %v693 = vld [vmem:[#allocation10 + $0x40] sm:$0xff]
    %v694 = vld [vmem:[#allocation10 + $0x48] sm:$0xff]
    %v695 = vld [vmem:[#allocation10 + $0x50] sm:$0xff]
    %v696 = vld [vmem:[#allocation10 + $0x58] sm:$0xff]
    %v697 = vld [vmem:[#allocation10 + $0x60] sm:$0xff]
    %v698 = vld [vmem:[#allocation10 + $0x68] sm:$0xff]
    %v699 = vld [vmem:[#allocation10 + $0x70] sm:$0xff]
    %v700 = vld [vmem:[#allocation10 + $0x78] sm:$0xff]
    %v717 = vunpack.c.l.b16 %v685
    %v718 = vunpack.c.h.b16 %v685
    %v719 = vunpack.c.l.b16 %v686
    %v720 = vunpack.c.h.b16 %v686
    %v721 = vunpack.c.l.b16 %v687
    %v722 = vunpack.c.h.b16 %v687
    %v723 = vunpack.c.l.b16 %v688
    %v724 = vunpack.c.h.b16 %v688
    %v725 = vunpack.c.l.b16 %v689
    %v726 = vunpack.c.h.b16 %v689
    %v727 = vunpack.c.l.b16 %v690
    %v728 = vunpack.c.h.b16 %v690
    %v729 = vunpack.c.l.b16 %v691
    %v730 = vunpack.c.h.b16 %v691
    %v731 = vunpack.c.l.b16 %v692
    %v732 = vunpack.c.h.b16 %v692
    %v733 = vunpack.c.l.b16 %v693
    %v734 = vunpack.c.h.b16 %v693
    %v735 = vunpack.c.l.b16 %v694
    %v736 = vunpack.c.h.b16 %v694
    %v737 = vunpack.c.l.b16 %v695
    %v738 = vunpack.c.h.b16 %v695
    %v739 = vunpack.c.l.b16 %v696
    %v740 = vunpack.c.h.b16 %v696
    %v741 = vunpack.c.l.b16 %v697
    %v742 = vunpack.c.h.b16 %v697
    %v743 = vunpack.c.l.b16 %v698
    %v744 = vunpack.c.h.b16 %v698
    %v745 = vunpack.c.l.b16 %v699
    %v746 = vunpack.c.h.b16 %v699
    %v747 = vunpack.c.l.b16 %v700
    %v748 = vunpack.c.h.b16 %v700
    %v749 = vpack.c.b16 %v719, %v717
    %v750 = vpack.c.b16 %v720, %v718
    %v751 = vpack.c.b16 %v723, %v721
    %v752 = vpack.c.b16 %v724, %v722
    %v753 = vpack.c.b16 %v727, %v725
    %v754 = vpack.c.b16 %v728, %v726
    %v755 = vpack.c.b16 %v731, %v729
    %v756 = vpack.c.b16 %v732, %v730
    %v757 = vpack.c.b16 %v735, %v733
    %v758 = vpack.c.b16 %v736, %v734
    %v759 = vpack.c.b16 %v739, %v737
    %v760 = vpack.c.b16 %v740, %v738
    %v761 = vpack.c.b16 %v743, %v741
    %v762 = vpack.c.b16 %v744, %v742
    %v763 = vpack.c.b16 %v747, %v745
    %v764 = vpack.c.b16 %v748, %v746
    %781 = vmatprep.subr.bf16.mxu0 %v750
    %782 = vmatpush1.bf16.msra.mxu0 %v749
    %783 = vmatprep.subr.bf16.mxu0 %v752
    %784 = vmatpush1.bf16.msra.mxu0 %v751
    %785 = vmatprep.subr.bf16.mxu0 %v754
    %786 = vmatpush1.bf16.msra.mxu0 %v753
    %787 = vmatprep.subr.bf16.mxu0 %v756
    %788 = vmatpush1.bf16.msra.mxu0 %v755
    %789 = vmatprep.subr.bf16.mxu0 %v758
    %790 = vmatpush1.bf16.msra.mxu0 %v757
    %791 = vmatprep.subr.bf16.mxu0 %v760
    %792 = vmatpush1.bf16.msra.mxu0 %v759
    %793 = vmatprep.subr.bf16.mxu0 %v762
    %794 = vmatpush1.bf16.msra.mxu0 %v761
    %795 = vmatprep.subr.bf16.mxu0 %v764
    %796 = vmatpush1.bf16.msra.mxu0 %v763
    %797 = vmatprep.subr.bf16.mxu0 0
    %798 = vmatpush1.bf16.msra.mxu0 0
    %799 = vmatprep.subr.bf16.mxu0 0
    %800 = vmatpush1.bf16.msra.mxu0 0
    %801 = vmatprep.subr.bf16.mxu0 0
    %802 = vmatpush1.bf16.msra.mxu0 0
    %803 = vmatprep.subr.bf16.mxu0 0
    %804 = vmatpush1.bf16.msra.mxu0 0
    %805 = vmatprep.subr.bf16.mxu0 0
    %806 = vmatpush1.bf16.msra.mxu0 0
    %807 = vmatprep.subr.bf16.mxu0 0
    %808 = vmatpush1.bf16.msra.mxu0 0
    %809 = vmatprep.subr.bf16.mxu0 0
    %810 = vmatpush1.bf16.msra.mxu0 0
    %811 = vmatprep.subr.bf16.mxu0 0
    %812 = vmatpush1.bf16.msra.mxu0 0
    %813 = vmatprep.mubr.bf16.mxu0 0
    %814 = vmatmul.mubr.bf16.gmra.mrb[0].mxu0 %v677
    %v815 = vpop.f32.mrb[0].mxu0
    %v816 = vadd.f32 0.0, %v815
    %v817 = vpop.f32.mrb[0].mxu0
    %v818 = vadd.f32 0.0, %v817
    %v819 = vpop.f32.mrb[0].mxu0
    %v820 = vadd.f32 0.0, %v819
    %v821 = vpop.f32.mrb[0].mxu0
    %v822 = vadd.f32 0.0, %v821
    %823 = vmatprep.mubr.bf16.mxu0 0
    %824 = vmatmul.mubr.bf16.gmra.mrb[0].mxu0 %v678
    %v825 = vpop.f32.mrb[0].mxu0
    %v826 = vadd.f32 0.0, %v825
    %v827 = vpop.f32.mrb[0].mxu0
    %v828 = vadd.f32 0.0, %v827
    %v829 = vpop.f32.mrb[0].mxu0
    %v830 = vadd.f32 0.0, %v829
    %v831 = vpop.f32.mrb[0].mxu0
    %v832 = vadd.f32 0.0, %v831
    %833 = vmatprep.mubr.bf16.mxu0 0
    %834 = vmatmul.mubr.bf16.gmra.mrb[0].mxu0 %v679
    %v835 = vpop.f32.mrb[0].mxu0
    %v836 = vadd.f32 0.0, %v835
    %v837 = vpop.f32.mrb[0].mxu0
    %v838 = vadd.f32 0.0, %v837
    %v839 = vpop.f32.mrb[0].mxu0
    %v840 = vadd.f32 0.0, %v839
    %v841 = vpop.f32.mrb[0].mxu0
    %v842 = vadd.f32 0.0, %v841
    %843 = vmatprep.mubr.bf16.mxu0 0
    %844 = vmatmul.mubr.bf16.gmra.mrb[0].mxu0 %v680
    %v845 = vpop.f32.mrb[0].mxu0
    %v846 = vadd.f32 0.0, %v845
    %v847 = vpop.f32.mrb[0].mxu0
    %v848 = vadd.f32 0.0, %v847
    %v849 = vpop.f32.mrb[0].mxu0
    %v850 = vadd.f32 0.0, %v849
    %v851 = vpop.f32.mrb[0].mxu0
    %v852 = vadd.f32 0.0, %v851
    %853 = vmatprep.mubr.bf16.mxu0 0
    %854 = vmatmul.mubr.bf16.gmra.mrb[0].mxu0 %v681
    %v855 = vpop.f32.mrb[0].mxu0
    %v856 = vadd.f32 0.0, %v855
    %v857 = vpop.f32.mrb[0].mxu0
    %v858 = vadd.f32 0.0, %v857
    %v859 = vpop.f32.mrb[0].mxu0
    %v860 = vadd.f32 0.0, %v859
    %v861 = vpop.f32.mrb[0].mxu0
    %v862 = vadd.f32 0.0, %v861
    %863 = vmatprep.mubr.bf16.mxu0 0
    %864 = vmatmul.mubr.bf16.gmra.mrb[0].mxu0 %v682
    %v865 = vpop.f32.mrb[0].mxu0
    %v866 = vadd.f32 0.0, %v865
    %v867 = vpop.f32.mrb[0].mxu0
    %v868 = vadd.f32 0.0, %v867
    %v869 = vpop.f32.mrb[0].mxu0
    %v870 = vadd.f32 0.0, %v869
    %v871 = vpop.f32.mrb[0].mxu0
    %v872 = vadd.f32 0.0, %v871
    %873 = vmatprep.mubr.bf16.mxu0 0
    %874 = vmatmul.mubr.bf16.gmra.mrb[0].mxu0 %v683
    %v875 = vpop.f32.mrb[0].mxu0
    %v876 = vadd.f32 0.0, %v875
    %v877 = vpop.f32.mrb[0].mxu0
    %v878 = vadd.f32 0.0, %v877
    %v879 = vpop.f32.mrb[0].mxu0
    %v880 = vadd.f32 0.0, %v879
    %v881 = vpop.f32.mrb[0].mxu0
    %v882 = vadd.f32 0.0, %v881
    %883 = vmatprep.mubr.bf16.mxu0 0
    %884 = vmatmul.mubr.bf16.gmra.mrb[0].mxu0 %v684
    %v885 = vpop.f32.mrb[0].mxu0
    %v886 = vadd.f32 0.0, %v885
    %v887 = vpop.f32.mrb[0].mxu0
    %v888 = vadd.f32 0.0, %v887
    %v889 = vpop.f32.mrb[0].mxu0
    %v890 = vadd.f32 0.0, %v889
    %v891 = vpop.f32.mrb[0].mxu0
    %v892 = vadd.f32 0.0, %v891
    %893 = vdwg.mxu0
    %v894 = vld [vmem:[#allocation2] sm:$0xff]
    %v895 = vld [vmem:[#allocation2 + $0x8] sm:$0xff]
    %v896 = vld [vmem:[#allocation2 + $0x10] sm:$0xff]
    %v897 = vld [vmem:[#allocation2 + $0x18] sm:$0xff]
    %v898 = vunpack.c.l.s8.bf16 %v894
    %v899 = vunpack.c.h.s8.bf16 %v894
    %v900 = vunpack.c.l.s8.bf16 %v895
    %v901 = vunpack.c.h.s8.bf16 %v895
    %v902 = vunpack.c.l.s8.bf16 %v896
    %v903 = vunpack.c.h.s8.bf16 %v896
    %v904 = vunpack.c.l.s8.bf16 %v897
    %v905 = vunpack.c.h.s8.bf16 %v897
    %v906 = vpack.c.bf16 %v820, %v816
    %v907 = vpack.c.bf16 %v830, %v826
    %v908 = vpack.c.bf16 %v840, %v836
    %v909 = vpack.c.bf16 %v850, %v846
    %v910 = vpack.c.bf16 %v860, %v856
    %v911 = vpack.c.bf16 %v870, %v866
    %v912 = vpack.c.bf16 %v880, %v876
    %v913 = vpack.c.bf16 %v890, %v886
    %914 = vmatprep.subr.bf16.mxu0 0
    %915 = vmatpush1.bf16.msra.mxu0 %v906
    %916 = vmatprep.subr.bf16.mxu0 0
    %917 = vmatpush1.bf16.msra.mxu0 %v907
    %918 = vmatprep.subr.bf16.mxu0 0
    %919 = vmatpush1.bf16.msra.mxu0 %v908
    %920 = vmatprep.subr.bf16.mxu0 0
    %921 = vmatpush1.bf16.msra.mxu0 %v909
    %922 = vmatprep.subr.bf16.mxu0 0
    %923 = vmatpush1.bf16.msra.mxu0 %v910
    %924 = vmatprep.subr.bf16.mxu0 0
    %925 = vmatpush1.bf16.msra.mxu0 %v911
    %926 = vmatprep.subr.bf16.mxu0 0
    %927 = vmatpush1.bf16.msra.mxu0 %v912
    %928 = vmatprep.subr.bf16.mxu0 0
    %929 = vmatpush1.bf16.msra.mxu0 %v913
    %930 = vmatprep.subr.bf16.mxu0 0
    %931 = vmatpush1.bf16.msra.mxu0 0
    %932 = vmatprep.subr.bf16.mxu0 0
    %933 = vmatpush1.bf16.msra.mxu0 0
    %934 = vmatprep.subr.bf16.mxu0 0
    %935 = vmatpush1.bf16.msra.mxu0 0
    %936 = vmatprep.subr.bf16.mxu0 0
    %937 = vmatpush1.bf16.msra.mxu0 0
    %938 = vmatprep.subr.bf16.mxu0 0
    %939 = vmatpush1.bf16.msra.mxu0 0
    %940 = vmatprep.subr.bf16.mxu0 0
    %941 = vmatpush1.bf16.msra.mxu0 0
    %942 = vmatprep.subr.bf16.mxu0 0
    %943 = vmatpush1.bf16.msra.mxu0 0
    %944 = vmatprep.subr.bf16.mxu0 0
    %945 = vmatpush1.bf16.msra.mxu0 0
    %946 = vmatprep.mubr.bf16.mxu0 0
    %947 = vmatmul.mubr.bf16.gmra.mrb[0].mxu0 %v898
    %v948 = vpop.f32.mrb[0].mxu0
    %v949 = vadd.f32 %v818, %v948
    %v950 = vpop.f32.mrb[0].mxu0
    %v951 = vpop.f32.mrb[0].mxu0
    %v952 = vadd.f32 %v822, %v951
    %v953 = vpop.f32.mrb[0].mxu0
    %954 = vmatprep.mubr.bf16.mxu0 0
    %955 = vmatmul.mubr.bf16.gmra.mrb[0].mxu0 %v899
    %v956 = vpop.f32.mrb[0].mxu0
    %v957 = vadd.f32 %v828, %v956
    %v958 = vpop.f32.mrb[0].mxu0
    %v959 = vpop.f32.mrb[0].mxu0
    %v960 = vadd.f32 %v832, %v959
    %v961 = vpop.f32.mrb[0].mxu0
    %962 = vmatprep.mubr.bf16.mxu0 0
    %963 = vmatmul.mubr.bf16.gmra.mrb[0].mxu0 %v900
    %v964 = vpop.f32.mrb[0].mxu0
    %v965 = vadd.f32 %v838, %v964
    %v966 = vpop.f32.mrb[0].mxu0
    %v967 = vpop.f32.mrb[0].mxu0
    %v968 = vadd.f32 %v842, %v967
    %v969 = vpop.f32.mrb[0].mxu0
    %970 = vmatprep.mubr.bf16.mxu0 0
    %971 = vmatmul.mubr.bf16.gmra.mrb[0].mxu0 %v901
    %v972 = vpop.f32.mrb[0].mxu0
    %v973 = vadd.f32 %v848, %v972
    %v974 = vpop.f32.mrb[0].mxu0
    %v975 = vpop.f32.mrb[0].mxu0
    %v976 = vadd.f32 %v852, %v975
    %v977 = vpop.f32.mrb[0].mxu0
    %978 = vmatprep.mubr.bf16.mxu0 0
    %979 = vmatmul.mubr.bf16.gmra.mrb[0].mxu0 %v902
    %v980 = vpop.f32.mrb[0].mxu0
    %v981 = vadd.f32 %v858, %v980
    %v982 = vpop.f32.mrb[0].mxu0
    %v983 = vpop.f32.mrb[0].mxu0
    %v984 = vadd.f32 %v862, %v983
    %v985 = vpop.f32.mrb[0].mxu0
    %986 = vmatprep.mubr.bf16.mxu0 0
    %987 = vmatmul.mubr.bf16.gmra.mrb[0].mxu0 %v903
    %v988 = vpop.f32.mrb[0].mxu0
    %v989 = vadd.f32 %v868, %v988
    %v990 = vpop.f32.mrb[0].mxu0
    %v991 = vpop.f32.mrb[0].mxu0
    %v992 = vadd.f32 %v872, %v991
    %v993 = vpop.f32.mrb[0].mxu0
    %994 = vmatprep.mubr.bf16.mxu0 0
    %995 = vmatmul.mubr.bf16.gmra.mrb[0].mxu0 %v904
    %v996 = vpop.f32.mrb[0].mxu0
    %v997 = vadd.f32 %v878, %v996
    %v998 = vpop.f32.mrb[0].mxu0
    %v999 = vpop.f32.mrb[0].mxu0
    %v1000 = vadd.f32 %v882, %v999
    %v1001 = vpop.f32.mrb[0].mxu0
    %1002 = vmatprep.mubr.bf16.mxu0 0
    %1003 = vmatmul.mubr.bf16.gmra.mrb[0].mxu0 %v905
    %v1004 = vpop.f32.mrb[0].mxu0
    %v1005 = vadd.f32 %v888, %v1004
    %v1006 = vpop.f32.mrb[0].mxu0
    %v1007 = vpop.f32.mrb[0].mxu0
    %v1008 = vadd.f32 %v892, %v1007
    %v1009 = vpop.f32.mrb[0].mxu0
    %1010 = vdwg.mxu0
    %v1011 = vmax.f32 %v949, 0.0
    %v1012 = vmax.f32 %v952, 0.0
    %v1013 = vmax.f32 %v957, 0.0
    %v1014 = vmax.f32 %v960, 0.0
    %v1015 = vmax.f32 %v965, 0.0
    %v1016 = vmax.f32 %v968, 0.0
    %v1017 = vmax.f32 %v973, 0.0
    %v1018 = vmax.f32 %v976, 0.0
    %v1019 = vmax.f32 %v981, 0.0
    %v1020 = vmax.f32 %v984, 0.0
    %v1021 = vmax.f32 %v989, 0.0
    %v1022 = vmax.f32 %v992, 0.0
    %v1023 = vmax.f32 %v997, 0.0
    %v1024 = vmax.f32 %v1000, 0.0
    %v1025 = vmax.f32 %v1005, 0.0
    %v1026 = vmax.f32 %v1008, 0.0
    %v1027 = vpack.c.bf16 %v1012, %v1011
    %v1028 = vpack.c.bf16 %v1014, %v1013
    %v1029 = vpack.c.bf16 %v1016, %v1015
    %v1030 = vpack.c.bf16 %v1018, %v1017
    %v1031 = vpack.c.bf16 %v1020, %v1019
    %v1032 = vpack.c.bf16 %v1022, %v1021
    %v1033 = vpack.c.bf16 %v1024, %v1023
    %v1034 = vpack.c.bf16 %v1026, %v1025
    %s1035 = scalar_lea.vmem [#allocation10], 128
    %v1036 = vld [vmem:[%s1035] sm:$0xff]
    %v1037 = vld [vmem:[%s1035 + $0x8] sm:$0xff]
    %v1038 = vld [vmem:[%s1035 + $0x10] sm:$0xff]
    %v1039 = vld [vmem:[%s1035 + $0x18] sm:$0xff]
    %v1040 = vld [vmem:[%s1035 + $0x20] sm:$0xff]
    %v1041 = vld [vmem:[%s1035 + $0x28] sm:$0xff]
    %v1042 = vld [vmem:[%s1035 + $0x30] sm:$0xff]
    %v1043 = vld [vmem:[%s1035 + $0x38] sm:$0xff]
    %v1044 = vld [vmem:[%s1035 + $0x40] sm:$0xff]
    %v1045 = vld [vmem:[%s1035 + $0x48] sm:$0xff]
    %v1046 = vld [vmem:[%s1035 + $0x50] sm:$0xff]
    %v1047 = vld [vmem:[%s1035 + $0x58] sm:$0xff]
    %v1048 = vld [vmem:[%s1035 + $0x60] sm:$0xff]
    %v1049 = vld [vmem:[%s1035 + $0x68] sm:$0xff]
    %v1050 = vld [vmem:[%s1035 + $0x70] sm:$0xff]
    %v1051 = vld [vmem:[%s1035 + $0x78] sm:$0xff]
    %v1068 = vunpack.c.l.b16 %v1036
    %v1069 = vunpack.c.h.b16 %v1036
    %v1070 = vunpack.c.l.b16 %v1037
    %v1071 = vunpack.c.h.b16 %v1037
    %v1072 = vunpack.c.l.b16 %v1038
    %v1073 = vunpack.c.h.b16 %v1038
    %v1074 = vunpack.c.l.b16 %v1039
    %v1075 = vunpack.c.h.b16 %v1039
    %v1076 = vunpack.c.l.b16 %v1040
    %v1077 = vunpack.c.h.b16 %v1040
    %v1078 = vunpack.c.l.b16 %v1041
    %v1079 = vunpack.c.h.b16 %v1041
    %v1080 = vunpack.c.l.b16 %v1042
    %v1081 = vunpack.c.h.b16 %v1042
    %v1082 = vunpack.c.l.b16 %v1043
    %v1083 = vunpack.c.h.b16 %v1043
    %v1084 = vunpack.c.l.b16 %v1044
    %v1085 = vunpack.c.h.b16 %v1044
    %v1086 = vunpack.c.l.b16 %v1045
    %v1087 = vunpack.c.h.b16 %v1045
    %v1088 = vunpack.c.l.b16 %v1046
    %v1089 = vunpack.c.h.b16 %v1046
    %v1090 = vunpack.c.l.b16 %v1047
    %v1091 = vunpack.c.h.b16 %v1047
    %v1092 = vunpack.c.l.b16 %v1048
    %v1093 = vunpack.c.h.b16 %v1048
    %v1094 = vunpack.c.l.b16 %v1049
    %v1095 = vunpack.c.h.b16 %v1049
    %v1096 = vunpack.c.l.b16 %v1050
    %v1097 = vunpack.c.h.b16 %v1050
    %v1098 = vunpack.c.l.b16 %v1051
    %v1099 = vunpack.c.h.b16 %v1051
    %v1100 = vpack.c.b16 %v1070, %v1068
    %v1101 = vpack.c.b16 %v1071, %v1069
    %v1102 = vpack.c.b16 %v1074, %v1072
    %v1103 = vpack.c.b16 %v1075, %v1073
    %v1104 = vpack.c.b16 %v1078, %v1076
    %v1105 = vpack.c.b16 %v1079, %v1077
    %v1106 = vpack.c.b16 %v1082, %v1080
    %v1107 = vpack.c.b16 %v1083, %v1081
    %v1108 = vpack.c.b16 %v1086, %v1084
    %v1109 = vpack.c.b16 %v1087, %v1085
    %v1110 = vpack.c.b16 %v1090, %v1088
    %v1111 = vpack.c.b16 %v1091, %v1089
    %v1112 = vpack.c.b16 %v1094, %v1092
    %v1113 = vpack.c.b16 %v1095, %v1093
    %v1114 = vpack.c.b16 %v1098, %v1096
    %v1115 = vpack.c.b16 %v1099, %v1097
    %1132 = vmatprep.subr.bf16.mxu0 %v1101
    %1133 = vmatpush1.bf16.msra.mxu0 %v1100
    %1134 = vmatprep.subr.bf16.mxu0 %v1103
    %1135 = vmatpush1.bf16.msra.mxu0 %v1102
    %1136 = vmatprep.subr.bf16.mxu0 %v1105
    %1137 = vmatpush1.bf16.msra.mxu0 %v1104
    %1138 = vmatprep.subr.bf16.mxu0 %v1107
    %1139 = vmatpush1.bf16.msra.mxu0 %v1106
    %1140 = vmatprep.subr.bf16.mxu0 %v1109
    %1141 = vmatpush1.bf16.msra.mxu0 %v1108
    %1142 = vmatprep.subr.bf16.mxu0 %v1111
    %1143 = vmatpush1.bf16.msra.mxu0 %v1110
    %1144 = vmatprep.subr.bf16.mxu0 %v1113
    %1145 = vmatpush1.bf16.msra.mxu0 %v1112
    %1146 = vmatprep.subr.bf16.mxu0 %v1115
    %1147 = vmatpush1.bf16.msra.mxu0 %v1114
    %1148 = vmatprep.subr.bf16.mxu0 0
    %1149 = vmatpush1.bf16.msra.mxu0 0
    %1150 = vmatprep.subr.bf16.mxu0 0
    %1151 = vmatpush1.bf16.msra.mxu0 0
    %1152 = vmatprep.subr.bf16.mxu0 0
    %1153 = vmatpush1.bf16.msra.mxu0 0
    %1154 = vmatprep.subr.bf16.mxu0 0
    %1155 = vmatpush1.bf16.msra.mxu0 0
    %1156 = vmatprep.subr.bf16.mxu0 0
    %1157 = vmatpush1.bf16.msra.mxu0 0
    %1158 = vmatprep.subr.bf16.mxu0 0
    %1159 = vmatpush1.bf16.msra.mxu0 0
    %1160 = vmatprep.subr.bf16.mxu0 0
    %1161 = vmatpush1.bf16.msra.mxu0 0
    %1162 = vmatprep.subr.bf16.mxu0 0
    %1163 = vmatpush1.bf16.msra.mxu0 0
    %1164 = vmatprep.mubr.bf16.mxu0 0
    %1165 = vmatmul.mubr.bf16.gmra.mrb[0].mxu0 %v1027
    %v1166 = vpop.f32.mrb[0].mxu0
    %v1167 = vadd.f32 0.0, %v1166
    %v1168 = vpop.f32.mrb[0].mxu0
    %v1169 = vadd.f32 0.0, %v1168
    %v1170 = vpop.f32.mrb[0].mxu0
    %v1171 = vadd.f32 0.0, %v1170
    %v1172 = vpop.f32.mrb[0].mxu0
    %v1173 = vadd.f32 0.0, %v1172
    %1174 = vmatprep.mubr.bf16.mxu0 0
    %1175 = vmatmul.mubr.bf16.gmra.mrb[0].mxu0 %v1028
    %v1176 = vpop.f32.mrb[0].mxu0
    %v1177 = vadd.f32 0.0, %v1176
    %v1178 = vpop.f32.mrb[0].mxu0
    %v1179 = vadd.f32 0.0, %v1178
    %v1180 = vpop.f32.mrb[0].mxu0
    %v1181 = vadd.f32 0.0, %v1180
    %v1182 = vpop.f32.mrb[0].mxu0
    %v1183 = vadd.f32 0.0, %v1182
    %1184 = vmatprep.mubr.bf16.mxu0 0
    %1185 = vmatmul.mubr.bf16.gmra.mrb[0].mxu0 %v1029
    %v1186 = vpop.f32.mrb[0].mxu0
    %v1187 = vadd.f32 0.0, %v1186
    %v1188 = vpop.f32.mrb[0].mxu0
    %v1189 = vadd.f32 0.0, %v1188
    %v1190 = vpop.f32.mrb[0].mxu0
    %v1191 = vadd.f32 0.0, %v1190
    %v1192 = vpop.f32.mrb[0].mxu0
    %v1193 = vadd.f32 0.0, %v1192
    %1194 = vmatprep.mubr.bf16.mxu0 0
    %1195 = vmatmul.mubr.bf16.gmra.mrb[0].mxu0 %v1030
    %v1196 = vpop.f32.mrb[0].mxu0
    %v1197 = vadd.f32 0.0, %v1196
    %v1198 = vpop.f32.mrb[0].mxu0
    %v1199 = vadd.f32 0.0, %v1198
    %v1200 = vpop.f32.mrb[0].mxu0
    %v1201 = vadd.f32 0.0, %v1200
    %v1202 = vpop.f32.mrb[0].mxu0
    %v1203 = vadd.f32 0.0, %v1202
    %1204 = vmatprep.mubr.bf16.mxu0 0
    %1205 = vmatmul.mubr.bf16.gmra.mrb[0].mxu0 %v1031
    %v1206 = vpop.f32.mrb[0].mxu0
    %v1207 = vadd.f32 0.0, %v1206
    %v1208 = vpop.f32.mrb[0].mxu0
    %v1209 = vadd.f32 0.0, %v1208
    %v1210 = vpop.f32.mrb[0].mxu0
    %v1211 = vadd.f32 0.0, %v1210
    %v1212 = vpop.f32.mrb[0].mxu0
    %v1213 = vadd.f32 0.0, %v1212
    %1214 = vmatprep.mubr.bf16.mxu0 0
    %1215 = vmatmul.mubr.bf16.gmra.mrb[0].mxu0 %v1032
    %v1216 = vpop.f32.mrb[0].mxu0
    %v1217 = vadd.f32 0.0, %v1216
    %v1218 = vpop.f32.mrb[0].mxu0
    %v1219 = vadd.f32 0.0, %v1218
    %v1220 = vpop.f32.mrb[0].mxu0
    %v1221 = vadd.f32 0.0, %v1220
    %v1222 = vpop.f32.mrb[0].mxu0
    %v1223 = vadd.f32 0.0, %v1222
    %1224 = vmatprep.mubr.bf16.mxu0 0
    %1225 = vmatmul.mubr.bf16.gmra.mrb[0].mxu0 %v1033
    %v1226 = vpop.f32.mrb[0].mxu0
    %v1227 = vadd.f32 0.0, %v1226
    %v1228 = vpop.f32.mrb[0].mxu0
    %v1229 = vadd.f32 0.0, %v1228
    %v1230 = vpop.f32.mrb[0].mxu0
    %v1231 = vadd.f32 0.0, %v1230
    %v1232 = vpop.f32.mrb[0].mxu0
    %v1233 = vadd.f32 0.0, %v1232
    %1234 = vmatprep.mubr.bf16.mxu0 0
    %1235 = vmatmul.mubr.bf16.gmra.mrb[0].mxu0 %v1034
    %v1236 = vpop.f32.mrb[0].mxu0
    %v1237 = vadd.f32 0.0, %v1236
    %v1238 = vpop.f32.mrb[0].mxu0
    %v1239 = vadd.f32 0.0, %v1238
    %v1240 = vpop.f32.mrb[0].mxu0
    %v1241 = vadd.f32 0.0, %v1240
    %v1242 = vpop.f32.mrb[0].mxu0
    %v1243 = vadd.f32 0.0, %v1242
    %1244 = vdwg.mxu0
    %v1245 = vpack.c.bf16 %v1171, %v1167
    %v1246 = vpack.c.bf16 %v1181, %v1177
    %v1247 = vpack.c.bf16 %v1191, %v1187
    %v1248 = vpack.c.bf16 %v1201, %v1197
    %v1249 = vpack.c.bf16 %v1211, %v1207
    %v1250 = vpack.c.bf16 %v1221, %v1217
    %v1251 = vpack.c.bf16 %v1231, %v1227
    %v1252 = vpack.c.bf16 %v1241, %v1237
    %1253 = vmatprep.subr.bf16.mxu0 0
    %1254 = vmatpush1.bf16.msra.mxu0 %v1245
    %1255 = vmatprep.subr.bf16.mxu0 0
    %1256 = vmatpush1.bf16.msra.mxu0 %v1246
    %1257 = vmatprep.subr.bf16.mxu0 0
    %1258 = vmatpush1.bf16.msra.mxu0 %v1247
    %1259 = vmatprep.subr.bf16.mxu0 0
    %1260 = vmatpush1.bf16.msra.mxu0 %v1248
    %1261 = vmatprep.subr.bf16.mxu0 0
    %1262 = vmatpush1.bf16.msra.mxu0 %v1249
    %1263 = vmatprep.subr.bf16.mxu0 0
    %1264 = vmatpush1.bf16.msra.mxu0 %v1250
    %1265 = vmatprep.subr.bf16.mxu0 0
    %1266 = vmatpush1.bf16.msra.mxu0 %v1251
    %1267 = vmatprep.subr.bf16.mxu0 0
    %1268 = vmatpush1.bf16.msra.mxu0 %v1252
    %1269 = vmatprep.subr.bf16.mxu0 0
    %1270 = vmatpush1.bf16.msra.mxu0 0
    %1271 = vmatprep.subr.bf16.mxu0 0
    %1272 = vmatpush1.bf16.msra.mxu0 0
    %1273 = vmatprep.subr.bf16.mxu0 0
    %1274 = vmatpush1.bf16.msra.mxu0 0
    %1275 = vmatprep.subr.bf16.mxu0 0
    %1276 = vmatpush1.bf16.msra.mxu0 0
    %1277 = vmatprep.subr.bf16.mxu0 0
    %1278 = vmatpush1.bf16.msra.mxu0 0
    %1279 = vmatprep.subr.bf16.mxu0 0
    %1280 = vmatpush1.bf16.msra.mxu0 0
    %1281 = vmatprep.subr.bf16.mxu0 0
    %1282 = vmatpush1.bf16.msra.mxu0 0
    %1283 = vmatprep.subr.bf16.mxu0 0
    %1284 = vmatpush1.bf16.msra.mxu0 0
    %1285 = vmatprep.mubr.bf16.mxu0 0
    %1286 = vmatmul.mubr.bf16.gmra.mrb[0].mxu0 %v898
    %v1287 = vpop.f32.mrb[0].mxu0
    %v1288 = vadd.f32 %v1169, %v1287
    %v1289 = vpop.f32.mrb[0].mxu0
    %v1290 = vpop.f32.mrb[0].mxu0
    %v1291 = vadd.f32 %v1173, %v1290
    %v1292 = vpop.f32.mrb[0].mxu0
    %1293 = vmatprep.mubr.bf16.mxu0 0
    %1294 = vmatmul.mubr.bf16.gmra.mrb[0].mxu0 %v899
    %v1295 = vpop.f32.mrb[0].mxu0
    %v1296 = vadd.f32 %v1179, %v1295
    %v1297 = vpop.f32.mrb[0].mxu0
    %v1298 = vpop.f32.mrb[0].mxu0
    %v1299 = vadd.f32 %v1183, %v1298
    %v1300 = vpop.f32.mrb[0].mxu0
    %1301 = vmatprep.mubr.bf16.mxu0 0
    %1302 = vmatmul.mubr.bf16.gmra.mrb[0].mxu0 %v900
    %v1303 = vpop.f32.mrb[0].mxu0
    %v1304 = vadd.f32 %v1189, %v1303
    %v1305 = vpop.f32.mrb[0].mxu0
    %v1306 = vpop.f32.mrb[0].mxu0
    %v1307 = vadd.f32 %v1193, %v1306
    %v1308 = vpop.f32.mrb[0].mxu0
    %1309 = vmatprep.mubr.bf16.mxu0 0
    %1310 = vmatmul.mubr.bf16.gmra.mrb[0].mxu0 %v901
    %v1311 = vpop.f32.mrb[0].mxu0
    %v1312 = vadd.f32 %v1199, %v1311
    %v1313 = vpop.f32.mrb[0].mxu0
    %v1314 = vpop.f32.mrb[0].mxu0
    %v1315 = vadd.f32 %v1203, %v1314
    %v1316 = vpop.f32.mrb[0].mxu0
    %1317 = vmatprep.mubr.bf16.mxu0 0
    %1318 = vmatmul.mubr.bf16.gmra.mrb[0].mxu0 %v902
    %v1319 = vpop.f32.mrb[0].mxu0
    %v1320 = vadd.f32 %v1209, %v1319
    %v1321 = vpop.f32.mrb[0].mxu0
    %v1322 = vpop.f32.mrb[0].mxu0
    %v1323 = vadd.f32 %v1213, %v1322
    %v1324 = vpop.f32.mrb[0].mxu0
    %1325 = vmatprep.mubr.bf16.mxu0 0
    %1326 = vmatmul.mubr.bf16.gmra.mrb[0].mxu0 %v903
    %v1327 = vpop.f32.mrb[0].mxu0
    %v1328 = vadd.f32 %v1219, %v1327
    %v1329 = vpop.f32.mrb[0].mxu0
    %v1330 = vpop.f32.mrb[0].mxu0
    %v1331 = vadd.f32 %v1223, %v1330
    %v1332 = vpop.f32.mrb[0].mxu0
    %1333 = vmatprep.mubr.bf16.mxu0 0
    %1334 = vmatmul.mubr.bf16.gmra.mrb[0].mxu0 %v904
    %v1335 = vpop.f32.mrb[0].mxu0
    %v1336 = vadd.f32 %v1229, %v1335
    %v1337 = vpop.f32.mrb[0].mxu0
    %v1338 = vpop.f32.mrb[0].mxu0
    %v1339 = vadd.f32 %v1233, %v1338
    %v1340 = vpop.f32.mrb[0].mxu0
    %1341 = vmatprep.mubr.bf16.mxu0 0
    %1342 = vmatmul.mubr.bf16.gmra.mrb[0].mxu0 %v905
    %v1343 = vpop.f32.mrb[0].mxu0
    %v1344 = vadd.f32 %v1239, %v1343
    %v1345 = vpop.f32.mrb[0].mxu0
    %v1346 = vpop.f32.mrb[0].mxu0
    %v1347 = vadd.f32 %v1243, %v1346
    %v1348 = vpop.f32.mrb[0].mxu0
    %1349 = vdwg.mxu0
    %v1350 = vmax.f32 %v1288, 0.0
    %v1351 = vmax.f32 %v1291, 0.0
    %v1352 = vmax.f32 %v1296, 0.0
    %v1353 = vmax.f32 %v1299, 0.0
    %v1354 = vmax.f32 %v1304, 0.0
    %v1355 = vmax.f32 %v1307, 0.0
    %v1356 = vmax.f32 %v1312, 0.0
    %v1357 = vmax.f32 %v1315, 0.0
    %v1358 = vmax.f32 %v1320, 0.0
    %v1359 = vmax.f32 %v1323, 0.0
    %v1360 = vmax.f32 %v1328, 0.0
    %v1361 = vmax.f32 %v1331, 0.0
    %v1362 = vmax.f32 %v1336, 0.0
    %v1363 = vmax.f32 %v1339, 0.0
    %v1364 = vmax.f32 %v1344, 0.0
    %v1365 = vmax.f32 %v1347, 0.0
    %v1366 = vpack.c.bf16 %v1351, %v1350
    %v1367 = vpack.c.bf16 %v1353, %v1352
    %v1368 = vpack.c.bf16 %v1355, %v1354
    %v1369 = vpack.c.bf16 %v1357, %v1356
    %v1370 = vpack.c.bf16 %v1359, %v1358
    %v1371 = vpack.c.bf16 %v1361, %v1360
    %v1372 = vpack.c.bf16 %v1363, %v1362
    %v1373 = vpack.c.bf16 %v1365, %v1364
    %v1374 = vld [vmem:[#allocation12] sm:$0xf]
    %v1375 = vld [vmem:[#allocation12 + $0x4] sm:$0xf]
    %v1376 = vld [vmem:[#allocation12 + $0x8] sm:$0xf]
    %v1377 = vld [vmem:[#allocation12 + $0xc] sm:$0xf]
    %v1378 = vld [vmem:[#allocation12 + $0x10] sm:$0xf]
    %v1379 = vld [vmem:[#allocation12 + $0x14] sm:$0xf]
    %v1380 = vld [vmem:[#allocation12 + $0x18] sm:$0xf]
    %v1381 = vld [vmem:[#allocation12 + $0x1c] sm:$0xf]
    %v1382 = vld [vmem:[#allocation12 + $0x20] sm:$0xf]
    %v1383 = vld [vmem:[#allocation12 + $0x24] sm:$0xf]
    %v1384 = vld [vmem:[#allocation12 + $0x28] sm:$0xf]
    %v1385 = vld [vmem:[#allocation12 + $0x2c] sm:$0xf]
    %v1386 = vld [vmem:[#allocation12 + $0x30] sm:$0xf]
    %v1387 = vld [vmem:[#allocation12 + $0x34] sm:$0xf]
    %v1388 = vld [vmem:[#allocation12 + $0x38] sm:$0xf]
    %v1389 = vld [vmem:[#allocation12 + $0x3c] sm:$0xf]
    %v1390 = vld [vmem:[%s7] sm:$0x1]
    %v1392 = vlaneseq
    %v1393 = vshrl.u32 %v1392, 7
    %v1394 = vsub.s32 0, %v1393
    %v1395 = vrot.slane %v1390, %v1394
    %v1413 = vunpack.c.l.b16 %v1374
    %v1414 = vunpack.c.l.b16 %v1375
    %v1415 = vunpack.c.l.b16 %v1376
    %v1416 = vunpack.c.l.b16 %v1377
    %v1417 = vunpack.c.l.b16 %v1378
    %v1418 = vunpack.c.l.b16 %v1379
    %v1419 = vunpack.c.l.b16 %v1380
    %v1420 = vunpack.c.l.b16 %v1381
    %v1421 = vunpack.c.l.b16 %v1382
    %v1422 = vunpack.c.l.b16 %v1383
    %v1423 = vunpack.c.l.b16 %v1384
    %v1424 = vunpack.c.l.b16 %v1385
    %v1425 = vunpack.c.l.b16 %v1386
    %v1426 = vunpack.c.l.b16 %v1387
    %v1427 = vunpack.c.l.b16 %v1388
    %v1428 = vunpack.c.l.b16 %v1389
    %v1429 = vpack.c.b16 %v1414, %v1413
    %v1430 = vpack.c.b16 %v1416, %v1415
    %v1431 = vpack.c.b16 %v1418, %v1417
    %v1432 = vpack.c.b16 %v1420, %v1419
    %v1433 = vpack.c.b16 %v1422, %v1421
    %v1434 = vpack.c.b16 %v1424, %v1423
    %v1435 = vpack.c.b16 %v1426, %v1425
    %v1436 = vpack.c.b16 %v1428, %v1427
    %1445 = vmatprep.subr.bf16.mxu0 0
    %1446 = vmatpush1.bf16.msra.mxu0 %v1429
    %1447 = vmatprep.subr.bf16.mxu0 0
    %1448 = vmatpush1.bf16.msra.mxu0 %v1430
    %1449 = vmatprep.subr.bf16.mxu0 0
    %1450 = vmatpush1.bf16.msra.mxu0 %v1431
    %1451 = vmatprep.subr.bf16.mxu0 0
    %1452 = vmatpush1.bf16.msra.mxu0 %v1432
    %1453 = vmatprep.subr.bf16.mxu0 0
    %1454 = vmatpush1.bf16.msra.mxu0 %v1433
    %1455 = vmatprep.subr.bf16.mxu0 0
    %1456 = vmatpush1.bf16.msra.mxu0 %v1434
    %1457 = vmatprep.subr.bf16.mxu0 0
    %1458 = vmatpush1.bf16.msra.mxu0 %v1435
    %1459 = vmatprep.subr.bf16.mxu0 0
    %1460 = vmatpush1.bf16.msra.mxu0 %v1436
    %1461 = vmatprep.subr.bf16.mxu0 0
    %1462 = vmatpush1.bf16.msra.mxu0 0
    %1463 = vmatprep.subr.bf16.mxu0 0
    %1464 = vmatpush1.bf16.msra.mxu0 0
    %1465 = vmatprep.subr.bf16.mxu0 0
    %1466 = vmatpush1.bf16.msra.mxu0 0
    %1467 = vmatprep.subr.bf16.mxu0 0
    %1468 = vmatpush1.bf16.msra.mxu0 0
    %1469 = vmatprep.subr.bf16.mxu0 0
    %1470 = vmatpush1.bf16.msra.mxu0 0
    %1471 = vmatprep.subr.bf16.mxu0 0
    %1472 = vmatpush1.bf16.msra.mxu0 0
    %1473 = vmatprep.subr.bf16.mxu0 0
    %1474 = vmatpush1.bf16.msra.mxu0 0
    %1475 = vmatprep.subr.bf16.mxu0 0
    %1476 = vmatpush1.bf16.msra.mxu0 0
    %1477 = vmatprep.mubr.bf16.mxu0 0
    %1478 = vmatmul.mubr.bf16.gmra.mrb[0].mxu0 %v1366
    %v1479 = vpop.f32.mrb[0].mxu0
    %v1480 = vadd.f32 %v1395, %v1479
    %v1481 = vpop.f32.mrb[0].mxu0
    %v1482 = vpop.f32.mrb[0].mxu0
    %v1483 = vadd.f32 %v1395, %v1482
    %v1484 = vpop.f32.mrb[0].mxu0
    %1485 = vmatprep.mubr.bf16.mxu0 0
    %1486 = vmatmul.mubr.bf16.gmra.mrb[0].mxu0 %v1367
    %v1487 = vpop.f32.mrb[0].mxu0
    %v1488 = vadd.f32 %v1395, %v1487
    %v1489 = vpop.f32.mrb[0].mxu0
    %v1490 = vpop.f32.mrb[0].mxu0
    %v1491 = vadd.f32 %v1395, %v1490
    %v1492 = vpop.f32.mrb[0].mxu0
    %1493 = vmatprep.mubr.bf16.mxu0 0
    %1494 = vmatmul.mubr.bf16.gmra.mrb[0].mxu0 %v1368
    %v1495 = vpop.f32.mrb[0].mxu0
    %v1496 = vadd.f32 %v1395, %v1495
    %v1497 = vpop.f32.mrb[0].mxu0
    %v1498 = vpop.f32.mrb[0].mxu0
    %v1499 = vadd.f32 %v1395, %v1498
    %v1500 = vpop.f32.mrb[0].mxu0
    %1501 = vmatprep.mubr.bf16.mxu0 0
    %1502 = vmatmul.mubr.bf16.gmra.mrb[0].mxu0 %v1369
    %v1503 = vpop.f32.mrb[0].mxu0
    %v1504 = vadd.f32 %v1395, %v1503
    %v1505 = vpop.f32.mrb[0].mxu0
    %v1506 = vpop.f32.mrb[0].mxu0
    %v1507 = vadd.f32 %v1395, %v1506
    %v1508 = vpop.f32.mrb[0].mxu0
    %1509 = vmatprep.mubr.bf16.mxu0 0
    %1510 = vmatmul.mubr.bf16.gmra.mrb[0].mxu0 %v1370
    %v1511 = vpop.f32.mrb[0].mxu0
    %v1512 = vadd.f32 %v1395, %v1511
    %v1513 = vpop.f32.mrb[0].mxu0
    %v1514 = vpop.f32.mrb[0].mxu0
    %v1515 = vadd.f32 %v1395, %v1514
    %v1516 = vpop.f32.mrb[0].mxu0
    %1517 = vmatprep.mubr.bf16.mxu0 0
    %1518 = vmatmul.mubr.bf16.gmra.mrb[0].mxu0 %v1371
    %v1519 = vpop.f32.mrb[0].mxu0
    %v1520 = vadd.f32 %v1395, %v1519
    %v1521 = vpop.f32.mrb[0].mxu0
    %v1522 = vpop.f32.mrb[0].mxu0
    %v1523 = vadd.f32 %v1395, %v1522
    %v1524 = vpop.f32.mrb[0].mxu0
    %1525 = vmatprep.mubr.bf16.mxu0 0
    %1526 = vmatmul.mubr.bf16.gmra.mrb[0].mxu0 %v1372
    %v1527 = vpop.f32.mrb[0].mxu0
    %v1528 = vadd.f32 %v1395, %v1527
    %v1529 = vpop.f32.mrb[0].mxu0
    %v1530 = vpop.f32.mrb[0].mxu0
    %v1531 = vadd.f32 %v1395, %v1530
    %v1532 = vpop.f32.mrb[0].mxu0
    %1533 = vmatprep.mubr.bf16.mxu0 0
    %1534 = vmatmul.mubr.bf16.gmra.mrb[0].mxu0 %v1373
    %v1535 = vpop.f32.mrb[0].mxu0
    %v1536 = vadd.f32 %v1395, %v1535
    %v1537 = vpop.f32.mrb[0].mxu0
    %v1538 = vpop.f32.mrb[0].mxu0
    %v1539 = vadd.f32 %v1395, %v1538
    %v1540 = vpop.f32.mrb[0].mxu0
    %1541 = vdwg.mxu0
    %v1542 = vmax.f32 %v1480, 0.0
    %v1543 = vmax.f32 %v1483, 0.0
    %v1544 = vmax.f32 %v1488, 0.0
    %v1545 = vmax.f32 %v1491, 0.0
    %v1546 = vmax.f32 %v1496, 0.0
    %v1547 = vmax.f32 %v1499, 0.0
    %v1548 = vmax.f32 %v1504, 0.0
    %v1549 = vmax.f32 %v1507, 0.0
    %v1550 = vmax.f32 %v1512, 0.0
    %v1551 = vmax.f32 %v1515, 0.0
    %v1552 = vmax.f32 %v1520, 0.0
    %v1553 = vmax.f32 %v1523, 0.0
    %v1554 = vmax.f32 %v1528, 0.0
    %v1555 = vmax.f32 %v1531, 0.0
    %v1556 = vmax.f32 %v1536, 0.0
    %v1557 = vmax.f32 %v1539, 0.0
    %v1558 = vpack.c.bf16 %v1543, %v1542
    %v1559 = vpack.c.bf16 %v1545, %v1544
    %v1560 = vpack.c.bf16 %v1547, %v1546
    %v1561 = vpack.c.bf16 %v1549, %v1548
    %v1562 = vpack.c.bf16 %v1551, %v1550
    %v1563 = vpack.c.bf16 %v1553, %v1552
    %v1564 = vpack.c.bf16 %v1555, %v1554
    %v1565 = vpack.c.bf16 %v1557, %v1556
    %v1566 = vld [vmem:[#allocation13] sm:$0xf]
    %v1567 = vld [vmem:[#allocation13 + $0x4] sm:$0xf]
    %v1568 = vld [vmem:[#allocation13 + $0x8] sm:$0xf]
    %v1569 = vld [vmem:[#allocation13 + $0xc] sm:$0xf]
    %v1570 = vld [vmem:[#allocation13 + $0x10] sm:$0xf]
    %v1571 = vld [vmem:[#allocation13 + $0x14] sm:$0xf]
    %v1572 = vld [vmem:[#allocation13 + $0x18] sm:$0xf]
    %v1573 = vld [vmem:[#allocation13 + $0x1c] sm:$0xf]
    %v1574 = vld [vmem:[#allocation13 + $0x20] sm:$0xf]
    %v1575 = vld [vmem:[#allocation13 + $0x24] sm:$0xf]
    %v1576 = vld [vmem:[#allocation13 + $0x28] sm:$0xf]
    %v1577 = vld [vmem:[#allocation13 + $0x2c] sm:$0xf]
    %v1578 = vld [vmem:[#allocation13 + $0x30] sm:$0xf]
    %v1579 = vld [vmem:[#allocation13 + $0x34] sm:$0xf]
    %v1580 = vld [vmem:[#allocation13 + $0x38] sm:$0xf]
    %v1581 = vld [vmem:[#allocation13 + $0x3c] sm:$0xf]
    %v1582 = vld [vmem:[%s9] sm:$0x1]
    %v1584 = vlaneseq
    %v1585 = vshrl.u32 %v1584, 7
    %v1586 = vsub.s32 0, %v1585
    %v1587 = vrot.slane %v1582, %v1586
    %v1605 = vunpack.c.l.b16 %v1566
    %v1606 = vunpack.c.l.b16 %v1567
    %v1607 = vunpack.c.l.b16 %v1568
    %v1608 = vunpack.c.l.b16 %v1569
    %v1609 = vunpack.c.l.b16 %v1570
    %v1610 = vunpack.c.l.b16 %v1571
    %v1611 = vunpack.c.l.b16 %v1572
    %v1612 = vunpack.c.l.b16 %v1573
    %v1613 = vunpack.c.l.b16 %v1574
    %v1614 = vunpack.c.l.b16 %v1575
    %v1615 = vunpack.c.l.b16 %v1576
    %v1616 = vunpack.c.l.b16 %v1577
    %v1617 = vunpack.c.l.b16 %v1578
    %v1618 = vunpack.c.l.b16 %v1579
    %v1619 = vunpack.c.l.b16 %v1580
    %v1620 = vunpack.c.l.b16 %v1581
    %v1621 = vpack.c.b16 %v1606, %v1605
    %v1622 = vpack.c.b16 %v1608, %v1607
    %v1623 = vpack.c.b16 %v1610, %v1609
    %v1624 = vpack.c.b16 %v1612, %v1611
    %v1625 = vpack.c.b16 %v1614, %v1613
    %v1626 = vpack.c.b16 %v1616, %v1615
    %v1627 = vpack.c.b16 %v1618, %v1617
    %v1628 = vpack.c.b16 %v1620, %v1619
    %1637 = vmatprep.subr.bf16.mxu0 0
    %1638 = vmatpush1.bf16.msra.mxu0 %v1621
    %1639 = vmatprep.subr.bf16.mxu0 0
    %1640 = vmatpush1.bf16.msra.mxu0 %v1622
    %1641 = vmatprep.subr.bf16.mxu0 0
    %1642 = vmatpush1.bf16.msra.mxu0 %v1623
    %1643 = vmatprep.subr.bf16.mxu0 0
    %1644 = vmatpush1.bf16.msra.mxu0 %v1624
    %1645 = vmatprep.subr.bf16.mxu0 0
    %1646 = vmatpush1.bf16.msra.mxu0 %v1625
    %1647 = vmatprep.subr.bf16.mxu0 0
    %1648 = vmatpush1.bf16.msra.mxu0 %v1626
    %1649 = vmatprep.subr.bf16.mxu0 0
    %1650 = vmatpush1.bf16.msra.mxu0 %v1627
    %1651 = vmatprep.subr.bf16.mxu0 0
    %1652 = vmatpush1.bf16.msra.mxu0 %v1628
    %1653 = vmatprep.subr.bf16.mxu0 0
    %1654 = vmatpush1.bf16.msra.mxu0 0
    %1655 = vmatprep.subr.bf16.mxu0 0
    %1656 = vmatpush1.bf16.msra.mxu0 0
    %1657 = vmatprep.subr.bf16.mxu0 0
    %1658 = vmatpush1.bf16.msra.mxu0 0
    %1659 = vmatprep.subr.bf16.mxu0 0
    %1660 = vmatpush1.bf16.msra.mxu0 0
    %1661 = vmatprep.subr.bf16.mxu0 0
    %1662 = vmatpush1.bf16.msra.mxu0 0
    %1663 = vmatprep.subr.bf16.mxu0 0
    %1664 = vmatpush1.bf16.msra.mxu0 0
    %1665 = vmatprep.subr.bf16.mxu0 0
    %1666 = vmatpush1.bf16.msra.mxu0 0
    %1667 = vmatprep.subr.bf16.mxu0 0
    %1668 = vmatpush1.bf16.msra.mxu0 0
    %1669 = vmatprep.mubr.bf16.mxu0 0
    %1670 = vmatmul.mubr.bf16.gmra.mrb[0].mxu0 %v1558
    %v1671 = vpop.f32.mrb[0].mxu0
    %v1672 = vadd.f32 %v1587, %v1671
    %v1673 = vpop.f32.mrb[0].mxu0
    %v1674 = vpop.f32.mrb[0].mxu0
    %v1675 = vadd.f32 %v1587, %v1674
    %v1676 = vpop.f32.mrb[0].mxu0
    %1677 = vmatprep.mubr.bf16.mxu0 0
    %1678 = vmatmul.mubr.bf16.gmra.mrb[0].mxu0 %v1559
    %v1679 = vpop.f32.mrb[0].mxu0
    %v1680 = vadd.f32 %v1587, %v1679
    %v1681 = vpop.f32.mrb[0].mxu0
    %v1682 = vpop.f32.mrb[0].mxu0
    %v1683 = vadd.f32 %v1587, %v1682
    %v1684 = vpop.f32.mrb[0].mxu0
    %1685 = vmatprep.mubr.bf16.mxu0 0
    %1686 = vmatmul.mubr.bf16.gmra.mrb[0].mxu0 %v1560
    %v1687 = vpop.f32.mrb[0].mxu0
    %v1688 = vadd.f32 %v1587, %v1687
    %v1689 = vpop.f32.mrb[0].mxu0
    %v1690 = vpop.f32.mrb[0].mxu0
    %v1691 = vadd.f32 %v1587, %v1690
    %v1692 = vpop.f32.mrb[0].mxu0
    %1693 = vmatprep.mubr.bf16.mxu0 0
    %1694 = vmatmul.mubr.bf16.gmra.mrb[0].mxu0 %v1561
    %v1695 = vpop.f32.mrb[0].mxu0
    %v1696 = vadd.f32 %v1587, %v1695
    %v1697 = vpop.f32.mrb[0].mxu0
    %v1698 = vpop.f32.mrb[0].mxu0
    %v1699 = vadd.f32 %v1587, %v1698
    %v1700 = vpop.f32.mrb[0].mxu0
    %1701 = vmatprep.mubr.bf16.mxu0 0
    %1702 = vmatmul.mubr.bf16.gmra.mrb[0].mxu0 %v1562
    %v1703 = vpop.f32.mrb[0].mxu0
    %v1704 = vadd.f32 %v1587, %v1703
    %v1705 = vpop.f32.mrb[0].mxu0
    %v1706 = vpop.f32.mrb[0].mxu0
    %v1707 = vadd.f32 %v1587, %v1706
    %v1708 = vpop.f32.mrb[0].mxu0
    %1709 = vmatprep.mubr.bf16.mxu0 0
    %1710 = vmatmul.mubr.bf16.gmra.mrb[0].mxu0 %v1563
    %v1711 = vpop.f32.mrb[0].mxu0
    %v1712 = vadd.f32 %v1587, %v1711
    %v1713 = vpop.f32.mrb[0].mxu0
    %v1714 = vpop.f32.mrb[0].mxu0
    %v1715 = vadd.f32 %v1587, %v1714
    %v1716 = vpop.f32.mrb[0].mxu0
    %1717 = vmatprep.mubr.bf16.mxu0 0
    %1718 = vmatmul.mubr.bf16.gmra.mrb[0].mxu0 %v1564
    %v1719 = vpop.f32.mrb[0].mxu0
    %v1720 = vadd.f32 %v1587, %v1719
    %v1721 = vpop.f32.mrb[0].mxu0
    %v1722 = vpop.f32.mrb[0].mxu0
    %v1723 = vadd.f32 %v1587, %v1722
    %v1724 = vpop.f32.mrb[0].mxu0
    %1725 = vmatprep.mubr.bf16.mxu0 0
    %1726 = vmatmul.mubr.bf16.gmra.mrb[0].mxu0 %v1565
    %v1727 = vpop.f32.mrb[0].mxu0
    %v1728 = vadd.f32 %v1587, %v1727
    %v1729 = vpop.f32.mrb[0].mxu0
    %v1730 = vpop.f32.mrb[0].mxu0
    %v1731 = vadd.f32 %v1587, %v1730
    %v1732 = vpop.f32.mrb[0].mxu0
    %1733 = vdwg.mxu0
    %1734 = vst [vmem:[#allocation15] sm:$0xff] %v1672
    %1735 = vst [vmem:[#allocation15 + $0x8] sm:$0xff] %v1675
    %1736 = vst [vmem:[#allocation15 + $0x10] sm:$0xff] %v1680
    %1737 = vst [vmem:[#allocation15 + $0x18] sm:$0xff] %v1683
    %1738 = vst [vmem:[#allocation15 + $0x20] sm:$0xff] %v1688
    %1739 = vst [vmem:[#allocation15 + $0x28] sm:$0xff] %v1691
    %1740 = vst [vmem:[#allocation15 + $0x30] sm:$0xff] %v1696
    %1741 = vst [vmem:[#allocation15 + $0x38] sm:$0xff] %v1699
    %1742 = vst [vmem:[#allocation15 + $0x40] sm:$0xff] %v1704
    %1743 = vst [vmem:[#allocation15 + $0x48] sm:$0xff] %v1707
    %1744 = vst [vmem:[#allocation15 + $0x50] sm:$0xff] %v1712
    %1745 = vst [vmem:[#allocation15 + $0x58] sm:$0xff] %v1715
    %1746 = vst [vmem:[#allocation15 + $0x60] sm:$0xff] %v1720
    %1747 = vst [vmem:[#allocation15 + $0x68] sm:$0xff] %v1723
    %1748 = vst [vmem:[#allocation15 + $0x70] sm:$0xff] %v1728
    %1749 = vst [vmem:[#allocation15 + $0x78] sm:$0xff] %v1731
    // Predicated region
    $region100: #{tpu_custom_call.1} parent=1 // pred_check
      _
    $region101: #{tpu_custom_call.1} parent=1 // pred_check_branch
      %1751 = sbr.rel (0) target = $region103
    $region102: #{tpu_custom_call.1} parent=1 // pred_region
      %s1753 = ssub.s32 2048, 2048
      %1754 = vsyncadd [#allocation6], %s1753
      %s1755 = sshll.u32 [#allocation15], 4
      %s1756 = int_to_ptr.vmem [resolvable:$true] %s1755
      %1761 = dma.vmem_to_hbm [thread:$0]  %s1756, 2048, %s11, [#allocation6], 128, 128, 8
    $region103: #{tpu_custom_call.1} parent=1 // pred_fallthru
      _
    // Predicated region
    $region104: #{tpu_custom_call.1} parent=1 // pred_check
      _
    $region105: #{tpu_custom_call.1} parent=1 // pred_check_branch
      %1763 = sbr.rel (0) target = $region107
    $region106: #{tpu_custom_call.1} parent=1 // pred_region
      %1764 = dma.done [#allocation6], 2048
    $region107: #{tpu_custom_call.1} parent=1 // pred_fallthru
      _
    %1765 = vsyncpa [#allocation5], 1
    %1766 = vsyncpa [#allocation8], 1
    %1767 = vsyncpa [#allocation11], 1
    %1768 = vsyncpa [#allocation14], 1
    %1769 = vsyncpa [#allocation6], 1
  %1770 = vsyncmov [#allocation3]
  %s1771 = vpop.sfrf %1770
  %p1772 = scmp.eq.s32.totalorder %s1771, 0
  %p1773 = pneg %p1772
  %1775 = shalt.err (%p1773)

</llo_original>
